<compile_context>
chip_gen: v7x
topology: tpu7x:2x2x1
jax: 0.10.0
libtpu: 0.0.40
codegen_flags: <defaults>
</compile_context>

<pallas_src>
import jax
import jax.numpy as jnp
import numpy as np
from jax.experimental import pallas as pl
from jax.experimental.pallas import tpu as pltpu

BN_EPS = 1e-5
NEG_SLOPE = 0.01  # F.leaky_relu default


# ----------------------------- in-kernel math helpers (take Refs, load at point of use) ---------

def _linear(h, w_ref, b_ref):
    # h: (B, in), w_ref: (in, out), b_ref: (1, out)
    return jnp.dot(h, w_ref[...], preferred_element_type=jnp.float32) + b_ref[...]


def _bn_lrelu(y, gamma_ref, beta_ref):
    # Training-mode BatchNorm1d (batch mean / biased batch variance) followed by leaky_relu.
    mean = jnp.mean(y, axis=0, keepdims=True)
    var = jnp.mean((y - mean) ** 2, axis=0, keepdims=True)
    yn = (y - mean) * jax.lax.rsqrt(var + BN_EPS) * gamma_ref[...] + beta_ref[...]
    return jnp.where(yn > 0, yn, NEG_SLOPE * yn)


def _resblock(h, fused_w_ref, fused_b_ref, gamma_ref, beta_ref):
    # fused_w_ref packs [fc_w | downsample_w] along the output dim -> one MXU push for both paths.
    out_dim = gamma_ref.shape[1]
    y = _linear(h, fused_w_ref, fused_b_ref)          # (B, 2*out_dim)
    main = y[:, :out_dim]
    skip = y[:, out_dim:]
    out = _bn_lrelu(main, gamma_ref, beta_ref)
    # TODO(synk): Dropout(0.3) identity here (eval semantics).
    return out + skip


# ----------------------------- the Pallas kernel -----------------------------

def vae_forward_kernel(x_ref, eps_ref,
                       fc1_w, fc1_b, bn1_g, bn1_b,
                       rb1_w, rb1_b, rb1_g, rb1_bt,
                       rb2_w, rb2_b, rb2_g, rb2_bt,
                       fc2122_w, fc2122_b,
                       fc3_w, fc3_b, bn3_g, bn3_b,
                       rb3_w, rb3_b, rb3_g, rb3_bt,
                       rb4_w, rb4_b, rb4_g, rb4_bt,
                       fc4_w, fc4_b,
                       recon_ref, mulogvar_ref):
    z_dim = eps_ref.shape[1]
    x = x_ref[...]

    # ---- encode ----
    h = _bn_lrelu(_linear(x, fc1_w, fc1_b), bn1_g, bn1_b)
    # TODO(synk): dropout1 identity (eval semantics).
    h = _resblock(h, rb1_w, rb1_b, rb1_g, rb1_bt)
    h = _resblock(h, rb2_w, rb2_b, rb2_g, rb2_bt)
    mulogvar = _linear(h, fc2122_w, fc2122_b)         # (B, 2*z_dim), fused fc21|fc22
    mu = mulogvar[:, :z_dim]
    logvar = mulogvar[:, z_dim:]

    # ---- reparameterize ----
    z = mu + eps_ref[...] * jnp.exp(0.5 * logvar)

    # ---- decode ----
    h = _bn_lrelu(_linear(z, fc3_w, fc3_b), bn3_g, bn3_b)
    # TODO(synk): dropout3 identity (eval semantics).
    h = _resblock(h, rb3_w, rb3_b, rb3_g, rb3_bt)
    h = _resblock(h, rb4_w, rb4_b, rb4_g, rb4_bt)

    recon_ref[...] = _linear(h, fc4_w, fc4_b)
    mulogvar_ref[...] = mulogvar                      # packed lane-dense (B, 2*z_dim) output


# ----------------------------- parameter setup (plain JAX glue) -----------------------------

def make_params(input_dim, hidden_dim, z_dim, key):
    """Deterministic parameter init; raw (un-fused) list mirroring the PyTorch module layout."""
    h2, h4 = hidden_dim // 2, hidden_dim // 4
    keys = iter(jax.random.split(key, 32))

    def lin(fan_in, fan_out):
        k1, k2 = jax.random.split(next(keys))
        bound = 1.0 / (fan_in ** 0.5)
        w = jax.random.uniform(k1, (fan_in, fan_out), jnp.float32, -bound, bound)
        b = jax.random.uniform(k2, (1, fan_out), jnp.float32, -bound, bound)
        return [w, b]

    def bn(dim):
        return [jnp.ones((1, dim), jnp.float32), jnp.zeros((1, dim), jnp.float32)]

    params = []
    params += lin(input_dim, hidden_dim) + bn(hidden_dim)                 # fc1, bn1
    params += lin(hidden_dim, h2) + bn(h2) + lin(hidden_dim, h2)          # resblock1 (fc, bn, ds)
    params += lin(h2, h4) + bn(h4) + lin(h2, h4)                          # resblock2
    params += lin(h4, z_dim) + lin(h4, z_dim)                             # fc21, fc22
    params += lin(z_dim, h4) + bn(h4)                                     # fc3, bn3
    params += lin(h4, h2) + bn(h2) + lin(h4, h2)                          # resblock3
    params += lin(h2, hidden_dim) + bn(hidden_dim) + lin(h2, hidden_dim)  # resblock4
    params += lin(hidden_dim, input_dim)                                  # fc4
    assert len(params) == 38
    return params


def fuse_params(p):
    """Concatenate paired weights sharing an input so the kernel issues one matmul per pair."""
    def fuse_pair(w1, b1, w2, b2):
        return [jnp.concatenate([w1, w2], axis=1), jnp.concatenate([b1, b2], axis=1)]

    fused = []
    fused += [p[0], p[1], p[2], p[3]]                                   # fc1, bn1
    fused += fuse_pair(p[4], p[5], p[8], p[9]) + [p[6], p[7]]           # rb1: [fc|ds], bn
    fused += fuse_pair(p[10], p[11], p[14], p[15]) + [p[12], p[13]]     # rb2
    fused += fuse_pair(p[16], p[17], p[18], p[19])                      # fc21|fc22
    fused += [p[20], p[21], p[22], p[23]]                               # fc3, bn3
    fused += fuse_pair(p[24], p[25], p[28], p[29]) + [p[26], p[27]]     # rb3
    fused += fuse_pair(p[30], p[31], p[34], p[35]) + [p[32], p[33]]     # rb4
    fused += [p[36], p[37]]                                             # fc4
    assert len(fused) == 28
    return fused


# ----------------------------- wrapper -----------------------------

def _cost_estimate(B, input_dim, hidden_dim, z_dim, fused_params):
    h2, h4 = hidden_dim // 2, hidden_dim // 4
    mm = [(input_dim, hidden_dim), (hidden_dim, 2 * h2), (h2, 2 * h4), (h4, 2 * z_dim),
          (z_dim, h4), (h4, 2 * h2), (h2, 2 * hidden_dim), (hidden_dim, input_dim)]
    flops = sum(2 * B * i * o for i, o in mm)
    transcendentals = B * z_dim + 6 * (hidden_dim + 2 * h2 + 2 * h4)  # exp + BN rsqrt (rough)
    param_bytes = sum(int(w.size) * 4 for w in fused_params)
    bytes_accessed = param_bytes + 4 * (B * input_dim + B * z_dim        # inputs
                                        + B * input_dim + B * 2 * z_dim)  # outputs
    return pl.CostEstimate(flops=flops, transcendentals=transcendentals,
                           bytes_accessed=bytes_accessed)


def vae_forward(x, eps, fused_params):
    B, input_dim = x.shape
    z_dim = eps.shape[1]
    hidden_dim = fused_params[0].shape[1]
    n_in = 2 + len(fused_params)

    out_shapes = (
        jax.ShapeDtypeStruct((B, input_dim), jnp.float32),   # recon_x
        jax.ShapeDtypeStruct((B, 2 * z_dim), jnp.float32),   # packed [mu | logvar]
    )
    vmem = lambda: pl.BlockSpec(memory_space=pltpu.MemorySpace.VMEM)

    recon, mulogvar = pl.pallas_call(
        vae_forward_kernel,
        out_shape=out_shapes,
        in_specs=[vmem() for _ in range(n_in)],
        out_specs=(vmem(), vmem()),
        compiler_params=pltpu.CompilerParams(vmem_limit_bytes=32 * 1024 * 1024),
        cost_estimate=_cost_estimate(B, input_dim, hidden_dim, z_dim, fused_params),
    )(x, eps, *fused_params)

    mu = mulogvar[:, :z_dim]
    logvar = mulogvar[:, z_dim:]
    return recon, mu, logvar


# ----------------------------- pure-JAX reference (for correctness check) -----------------------------

def reference_forward(x, eps, p):
    def lin(h, w, b): return jnp.dot(h, w, preferred_element_type=jnp.float32) + b

    def bn(y, g, bt):
        m = jnp.mean(y, axis=0, keepdims=True)
        v = jnp.mean((y - m) ** 2, axis=0, keepdims=True)
        return (y - m) * jax.lax.rsqrt(v + BN_EPS) * g + bt

    def lrelu(y): return jnp.where(y > 0, y, NEG_SLOPE * y)

    def rb(h, fw, fb, g, bt, dw, db):
        return lrelu(bn(lin(h, fw, fb), g, bt)) + lin(h, dw, db)

    h = lrelu(bn(lin(x, p[0], p[1]), p[2], p[3]))
    h = rb(h, p[4], p[5], p[6], p[7], p[8], p[9])
    h = rb(h, p[10], p[11], p[12], p[13], p[14], p[15])
    mu = lin(h, p[16], p[17])
    logvar = lin(h, p[18], p[19])
    z = mu + eps * jnp.exp(0.5 * logvar)
    h = lrelu(bn(lin(z, p[20], p[21]), p[22], p[23]))
    h = rb(h, p[24], p[25], p[26], p[27], p[28], p[29])
    h = rb(h, p[30], p[31], p[32], p[33], p[34], p[35])
    return lin(h, p[36], p[37]), mu, logvar


if __name__ == "__main__":
    B, INPUT_DIM, HIDDEN_DIM, Z_DIM = 8, 32, 32, 8

    key = jax.random.PRNGKey(0)
    kx, keps, kp = jax.random.split(key, 3)
    # x.view(-1, x.shape[1]) in the PyTorch forward is an identity for 2-D input.
    x = jax.random.normal(kx, (B, INPUT_DIM), jnp.float32)
    eps = jax.random.normal(keps, (B, Z_DIM), jnp.float32)

    raw_params = make_params(INPUT_DIM, HIDDEN_DIM, Z_DIM, kp)
    fused_params = fuse_params(raw_params)

    recon, mu, logvar = vae_forward(x, eps, fused_params)
    jax.block_until_ready((recon, mu, logvar))

    assert recon.shape == (B, INPUT_DIM)
    assert mu.shape == (B, Z_DIM) and logvar.shape == (B, Z_DIM)
    assert recon.dtype == jnp.float32

    r_ref, m_ref, l_ref = reference_forward(x, eps, raw_params)
    np.testing.assert_allclose(np.asarray(mu), np.asarray(m_ref), rtol=5e-2, atol=5e-2)
    np.testing.assert_allclose(np.asarray(logvar), np.asarray(l_ref), rtol=5e-2, atol=5e-2)
    np.testing.assert_allclose(np.asarray(recon), np.asarray(r_ref), rtol=5e-2, atol=5e-2)

    print("KERNEL_OK")
</pallas_src>

<mosaic_0001>
module attributes {stable_mosaic.version = 11 : i64} {
  func.func @vae_forward_kernel(%arg0: memref<8x32xf32, #tpu.memory_space<vmem>>, %arg1: memref<8x8xf32, #tpu.memory_space<vmem>>, %arg2: memref<32x32xf32, #tpu.memory_space<vmem>>, %arg3: memref<1x32xf32, #tpu.memory_space<vmem>>, %arg4: memref<1x32xf32, #tpu.memory_space<vmem>>, %arg5: memref<1x32xf32, #tpu.memory_space<vmem>>, %arg6: memref<32x32xf32, #tpu.memory_space<vmem>>, %arg7: memref<1x32xf32, #tpu.memory_space<vmem>>, %arg8: memref<1x16xf32, #tpu.memory_space<vmem>>, %arg9: memref<1x16xf32, #tpu.memory_space<vmem>>, %arg10: memref<16x16xf32, #tpu.memory_space<vmem>>, %arg11: memref<1x16xf32, #tpu.memory_space<vmem>>, %arg12: memref<1x8xf32, #tpu.memory_space<vmem>>, %arg13: memref<1x8xf32, #tpu.memory_space<vmem>>, %arg14: memref<8x16xf32, #tpu.memory_space<vmem>>, %arg15: memref<1x16xf32, #tpu.memory_space<vmem>>, %arg16: memref<8x8xf32, #tpu.memory_space<vmem>>, %arg17: memref<1x8xf32, #tpu.memory_space<vmem>>, %arg18: memref<1x8xf32, #tpu.memory_space<vmem>>, %arg19: memref<1x8xf32, #tpu.memory_space<vmem>>, %arg20: memref<8x32xf32, #tpu.memory_space<vmem>>, %arg21: memref<1x32xf32, #tpu.memory_space<vmem>>, %arg22: memref<1x16xf32, #tpu.memory_space<vmem>>, %arg23: memref<1x16xf32, #tpu.memory_space<vmem>>, %arg24: memref<16x64xf32, #tpu.memory_space<vmem>>, %arg25: memref<1x64xf32, #tpu.memory_space<vmem>>, %arg26: memref<1x32xf32, #tpu.memory_space<vmem>>, %arg27: memref<1x32xf32, #tpu.memory_space<vmem>>, %arg28: memref<32x32xf32, #tpu.memory_space<vmem>>, %arg29: memref<1x32xf32, #tpu.memory_space<vmem>>, %arg30: memref<8x32xf32, #tpu.memory_space<vmem>>, %arg31: memref<8x16xf32, #tpu.memory_space<vmem>>) attributes {dimension_semantics = [], scalar_prefetch = 0 : i64, scratch_operands = 0 : i64, tpu.core_type = #tpu.core_type<tc>} {
    %c0 = arith.constant 0 : index
    %c0_0 = arith.constant 0 : index
    %0 = vector.load %arg0[%c0, %c0_0] : memref<8x32xf32, #tpu.memory_space<vmem>>, vector<8x32xf32>
    %c0_1 = arith.constant 0 : index
    %c0_2 = arith.constant 0 : index
    %1 = vector.load %arg2[%c0_1, %c0_2] : memref<32x32xf32, #tpu.memory_space<vmem>>, vector<32x32xf32>
    %cst = arith.constant dense<0.000000e+00> : vector<8x32xf32>
    %2 = tpu.matmul %0, %1, %cst {dimension_numbers = #tpu.dot_dimension_numbers<[1], [0], [0], [1], [0, 0, 1, 1], [], []>} : vector<8x32xf32>, vector<32x32xf32>, vector<8x32xf32> -> vector<8x32xf32>
    %c0_3 = arith.constant 0 : index
    %c0_4 = arith.constant 0 : index
    %3 = vector.load %arg3[%c0_3, %c0_4] : memref<1x32xf32, #tpu.memory_space<vmem>>, vector<1x32xf32>
    %4 = vector.broadcast %3 : vector<1x32xf32> to vector<8x32xf32>
    %5 = arith.addf %2, %4 : vector<8x32xf32>
    %cst_5 = arith.constant dense<0.000000e+00> : vector<32xf32>
    %6 = vector.multi_reduction <add>, %5, %cst_5 [0] : vector<8x32xf32> to vector<32xf32>
    %7 = vector.shape_cast %6 : vector<32xf32> to vector<1x32xf32>
    %cst_6 = arith.constant 8.000000e+00 : f32
    %8 = vector.broadcast %cst_6 : f32 to vector<1x32xf32>
    %9 = arith.divf %7, %8 : vector<1x32xf32>
    %10 = vector.broadcast %9 : vector<1x32xf32> to vector<8x32xf32>
    %11 = arith.subf %5, %10 : vector<8x32xf32>
    %12 = arith.mulf %11, %11 : vector<8x32xf32>
    %cst_7 = arith.constant dense<0.000000e+00> : vector<32xf32>
    %13 = vector.multi_reduction <add>, %12, %cst_7 [0] : vector<8x32xf32> to vector<32xf32>
    %14 = vector.shape_cast %13 : vector<32xf32> to vector<1x32xf32>
    %cst_8 = arith.constant 8.000000e+00 : f32
    %15 = vector.broadcast %cst_8 : f32 to vector<1x32xf32>
    %16 = arith.divf %14, %15 : vector<1x32xf32>
    %17 = vector.broadcast %9 : vector<1x32xf32> to vector<8x32xf32>
    %18 = arith.subf %5, %17 : vector<8x32xf32>
    %cst_9 = arith.constant 9.99999974E-6 : f32
    %19 = vector.broadcast %cst_9 : f32 to vector<1x32xf32>
    %20 = arith.addf %16, %19 : vector<1x32xf32>
    %21 = math.rsqrt %20 : vector<1x32xf32>
    %22 = vector.broadcast %21 : vector<1x32xf32> to vector<8x32xf32>
    %23 = arith.mulf %18, %22 : vector<8x32xf32>
    %c0_10 = arith.constant 0 : index
    %c0_11 = arith.constant 0 : index
    %24 = vector.load %arg4[%c0_10, %c0_11] : memref<1x32xf32, #tpu.memory_space<vmem>>, vector<1x32xf32>
    %25 = vector.broadcast %24 : vector<1x32xf32> to vector<8x32xf32>
    %26 = arith.mulf %23, %25 : vector<8x32xf32>
    %c0_12 = arith.constant 0 : index
    %c0_13 = arith.constant 0 : index
    %27 = vector.load %arg5[%c0_12, %c0_13] : memref<1x32xf32, #tpu.memory_space<vmem>>, vector<1x32xf32>
    %28 = vector.broadcast %27 : vector<1x32xf32> to vector<8x32xf32>
    %29 = arith.addf %26, %28 : vector<8x32xf32>
    %cst_14 = arith.constant 0.000000e+00 : f32
    %30 = vector.broadcast %cst_14 : f32 to vector<8x32xf32>
    %31 = arith.cmpf ogt, %29, %30 : vector<8x32xf32>
    %cst_15 = arith.constant 0.00999999977 : f32
    %32 = vector.broadcast %cst_15 : f32 to vector<8x32xf32>
    %33 = arith.mulf %32, %29 : vector<8x32xf32>
    %34 = arith.select %31, %29, %33 : vector<8x32xi1>, vector<8x32xf32>
    %c0_16 = arith.constant 0 : index
    %c0_17 = arith.constant 0 : index
    %35 = vector.load %arg6[%c0_16, %c0_17] : memref<32x32xf32, #tpu.memory_space<vmem>>, vector<32x32xf32>
    %cst_18 = arith.constant dense<0.000000e+00> : vector<8x32xf32>
    %36 = tpu.matmul %34, %35, %cst_18 {dimension_numbers = #tpu.dot_dimension_numbers<[1], [0], [0], [1], [0, 0, 1, 1], [], []>} : vector<8x32xf32>, vector<32x32xf32>, vector<8x32xf32> -> vector<8x32xf32>
    %c0_19 = arith.constant 0 : index
    %c0_20 = arith.constant 0 : index
    %37 = vector.load %arg7[%c0_19, %c0_20] : memref<1x32xf32, #tpu.memory_space<vmem>>, vector<1x32xf32>
    %38 = vector.broadcast %37 : vector<1x32xf32> to vector<8x32xf32>
    %39 = arith.addf %36, %38 : vector<8x32xf32>
    %40 = vector.extract_strided_slice %39 {offsets = [0, 0], sizes = [8, 16], strides = [1, 1]} : vector<8x32xf32> to vector<8x16xf32>
    %41 = vector.extract_strided_slice %39 {offsets = [0, 16], sizes = [8, 16], strides = [1, 1]} : vector<8x32xf32> to vector<8x16xf32>
    %cst_21 = arith.constant dense<0.000000e+00> : vector<16xf32>
    %42 = vector.multi_reduction <add>, %40, %cst_21 [0] : vector<8x16xf32> to vector<16xf32>
    %43 = vector.shape_cast %42 : vector<16xf32> to vector<1x16xf32>
    %cst_22 = arith.constant 8.000000e+00 : f32
    %44 = vector.broadcast %cst_22 : f32 to vector<1x16xf32>
    %45 = arith.divf %43, %44 : vector<1x16xf32>
    %46 = vector.broadcast %45 : vector<1x16xf32> to vector<8x16xf32>
    %47 = arith.subf %40, %46 : vector<8x16xf32>
    %48 = arith.mulf %47, %47 : vector<8x16xf32>
    %cst_23 = arith.constant dense<0.000000e+00> : vector<16xf32>
    %49 = vector.multi_reduction <add>, %48, %cst_23 [0] : vector<8x16xf32> to vector<16xf32>
    %50 = vector.shape_cast %49 : vector<16xf32> to vector<1x16xf32>
    %cst_24 = arith.constant 8.000000e+00 : f32
    %51 = vector.broadcast %cst_24 : f32 to vector<1x16xf32>
    %52 = arith.divf %50, %51 : vector<1x16xf32>
    %53 = vector.broadcast %45 : vector<1x16xf32> to vector<8x16xf32>
    %54 = arith.subf %40, %53 : vector<8x16xf32>
    %cst_25 = arith.constant 9.99999974E-6 : f32
    %55 = vector.broadcast %cst_25 : f32 to vector<1x16xf32>
    %56 = arith.addf %52, %55 : vector<1x16xf32>
    %57 = math.rsqrt %56 : vector<1x16xf32>
    %58 = vector.broadcast %57 : vector<1x16xf32> to vector<8x16xf32>
    %59 = arith.mulf %54, %58 : vector<8x16xf32>
    %c0_26 = arith.constant 0 : index
    %c0_27 = arith.constant 0 : index
    %60 = vector.load %arg8[%c0_26, %c0_27] : memref<1x16xf32, #tpu.memory_space<vmem>>, vector<1x16xf32>
    %61 = vector.broadcast %60 : vector<1x16xf32> to vector<8x16xf32>
    %62 = arith.mulf %59, %61 : vector<8x16xf32>
    %c0_28 = arith.constant 0 : index
    %c0_29 = arith.constant 0 : index
    %63 = vector.load %arg9[%c0_28, %c0_29] : memref<1x16xf32, #tpu.memory_space<vmem>>, vector<1x16xf32>
    %64 = vector.broadcast %63 : vector<1x16xf32> to vector<8x16xf32>
    %65 = arith.addf %62, %64 : vector<8x16xf32>
    %cst_30 = arith.constant 0.000000e+00 : f32
    %66 = vector.broadcast %cst_30 : f32 to vector<8x16xf32>
    %67 = arith.cmpf ogt, %65, %66 : vector<8x16xf32>
    %cst_31 = arith.constant 0.00999999977 : f32
    %68 = vector.broadcast %cst_31 : f32 to vector<8x16xf32>
    %69 = arith.mulf %68, %65 : vector<8x16xf32>
    %70 = arith.select %67, %65, %69 : vector<8x16xi1>, vector<8x16xf32>
    %71 = arith.addf %70, %41 : vector<8x16xf32>
    %c0_32 = arith.constant 0 : index
    %c0_33 = arith.constant 0 : index
    %72 = vector.load %arg10[%c0_32, %c0_33] : memref<16x16xf32, #tpu.memory_space<vmem>>, vector<16x16xf32>
    %cst_34 = arith.constant dense<0.000000e+00> : vector<8x16xf32>
    %73 = tpu.matmul %71, %72, %cst_34 {dimension_numbers = #tpu.dot_dimension_numbers<[1], [0], [0], [1], [0, 0, 1, 1], [], []>} : vector<8x16xf32>, vector<16x16xf32>, vector<8x16xf32> -> vector<8x16xf32>
    %c0_35 = arith.constant 0 : index
    %c0_36 = arith.constant 0 : index
    %74 = vector.load %arg11[%c0_35, %c0_36] : memref<1x16xf32, #tpu.memory_space<vmem>>, vector<1x16xf32>
    %75 = vector.broadcast %74 : vector<1x16xf32> to vector<8x16xf32>
    %76 = arith.addf %73, %75 : vector<8x16xf32>
    %77 = vector.extract_strided_slice %76 {offsets = [0, 0], sizes = [8, 8], strides = [1, 1]} : vector<8x16xf32> to vector<8x8xf32>
    %78 = vector.extract_strided_slice %76 {offsets = [0, 8], sizes = [8, 8], strides = [1, 1]} : vector<8x16xf32> to vector<8x8xf32>
    %cst_37 = arith.constant dense<0.000000e+00> : vector<8xf32>
    %79 = vector.multi_reduction <add>, %77, %cst_37 [0] : vector<8x8xf32> to vector<8xf32>
    %80 = vector.shape_cast %79 : vector<8xf32> to vector<1x8xf32>
    %cst_38 = arith.constant 8.000000e+00 : f32
    %81 = vector.broadcast %cst_38 : f32 to vector<1x8xf32>
    %82 = arith.divf %80, %81 : vector<1x8xf32>
    %83 = vector.broadcast %82 : vector<1x8xf32> to vector<8x8xf32>
    %84 = arith.subf %77, %83 : vector<8x8xf32>
    %85 = arith.mulf %84, %84 : vector<8x8xf32>
    %cst_39 = arith.constant dense<0.000000e+00> : vector<8xf32>
    %86 = vector.multi_reduction <add>, %85, %cst_39 [0] : vector<8x8xf32> to vector<8xf32>
    %87 = vector.shape_cast %86 : vector<8xf32> to vector<1x8xf32>
    %cst_40 = arith.constant 8.000000e+00 : f32
    %88 = vector.broadcast %cst_40 : f32 to vector<1x8xf32>
    %89 = arith.divf %87, %88 : vector<1x8xf32>
    %90 = vector.broadcast %82 : vector<1x8xf32> to vector<8x8xf32>
    %91 = arith.subf %77, %90 : vector<8x8xf32>
    %cst_41 = arith.constant 9.99999974E-6 : f32
    %92 = vector.broadcast %cst_41 : f32 to vector<1x8xf32>
    %93 = arith.addf %89, %92 : vector<1x8xf32>
    %94 = math.rsqrt %93 : vector<1x8xf32>
    %95 = vector.broadcast %94 : vector<1x8xf32> to vector<8x8xf32>
    %96 = arith.mulf %91, %95 : vector<8x8xf32>
    %c0_42 = arith.constant 0 : index
    %c0_43 = arith.constant 0 : index
    %97 = vector.load %arg12[%c0_42, %c0_43] : memref<1x8xf32, #tpu.memory_space<vmem>>, vector<1x8xf32>
    %98 = vector.broadcast %97 : vector<1x8xf32> to vector<8x8xf32>
    %99 = arith.mulf %96, %98 : vector<8x8xf32>
    %c0_44 = arith.constant 0 : index
    %c0_45 = arith.constant 0 : index
    %100 = vector.load %arg13[%c0_44, %c0_45] : memref<1x8xf32, #tpu.memory_space<vmem>>, vector<1x8xf32>
    %101 = vector.broadcast %100 : vector<1x8xf32> to vector<8x8xf32>
    %102 = arith.addf %99, %101 : vector<8x8xf32>
    %cst_46 = arith.constant 0.000000e+00 : f32
    %103 = vector.broadcast %cst_46 : f32 to vector<8x8xf32>
    %104 = arith.cmpf ogt, %102, %103 : vector<8x8xf32>
    %cst_47 = arith.constant 0.00999999977 : f32
    %105 = vector.broadcast %cst_47 : f32 to vector<8x8xf32>
    %106 = arith.mulf %105, %102 : vector<8x8xf32>
    %107 = arith.select %104, %102, %106 : vector<8x8xi1>, vector<8x8xf32>
    %108 = arith.addf %107, %78 : vector<8x8xf32>
    %c0_48 = arith.constant 0 : index
    %c0_49 = arith.constant 0 : index
    %109 = vector.load %arg14[%c0_48, %c0_49] : memref<8x16xf32, #tpu.memory_space<vmem>>, vector<8x16xf32>
    %cst_50 = arith.constant dense<0.000000e+00> : vector<8x16xf32>
    %110 = tpu.matmul %108, %109, %cst_50 {dimension_numbers = #tpu.dot_dimension_numbers<[1], [0], [0], [1], [0, 0, 1, 1], [], []>} : vector<8x8xf32>, vector<8x16xf32>, vector<8x16xf32> -> vector<8x16xf32>
    %c0_51 = arith.constant 0 : index
    %c0_52 = arith.constant 0 : index
    %111 = vector.load %arg15[%c0_51, %c0_52] : memref<1x16xf32, #tpu.memory_space<vmem>>, vector<1x16xf32>
    %112 = vector.broadcast %111 : vector<1x16xf32> to vector<8x16xf32>
    %113 = arith.addf %110, %112 : vector<8x16xf32>
    %114 = vector.extract_strided_slice %113 {offsets = [0, 0], sizes = [8, 8], strides = [1, 1]} : vector<8x16xf32> to vector<8x8xf32>
    %115 = vector.extract_strided_slice %113 {offsets = [0, 8], sizes = [8, 8], strides = [1, 1]} : vector<8x16xf32> to vector<8x8xf32>
    %c0_53 = arith.constant 0 : index
    %c0_54 = arith.constant 0 : index
    %116 = vector.load %arg1[%c0_53, %c0_54] : memref<8x8xf32, #tpu.memory_space<vmem>>, vector<8x8xf32>
    %cst_55 = arith.constant 5.000000e-01 : f32
    %117 = vector.broadcast %cst_55 : f32 to vector<8x8xf32>
    %118 = arith.mulf %117, %115 : vector<8x8xf32>
    %119 = math.exp %118 : vector<8x8xf32>
    %120 = arith.mulf %116, %119 : vector<8x8xf32>
    %121 = arith.addf %114, %120 : vector<8x8xf32>
    %c0_56 = arith.constant 0 : index
    %c0_57 = arith.constant 0 : index
    %122 = vector.load %arg16[%c0_56, %c0_57] : memref<8x8xf32, #tpu.memory_space<vmem>>, vector<8x8xf32>
    %cst_58 = arith.constant dense<0.000000e+00> : vector<8x8xf32>
    %123 = tpu.matmul %121, %122, %cst_58 {dimension_numbers = #tpu.dot_dimension_numbers<[1], [0], [0], [1], [0, 0, 1, 1], [], []>} : vector<8x8xf32>, vector<8x8xf32>, vector<8x8xf32> -> vector<8x8xf32>
    %c0_59 = arith.constant 0 : index
    %c0_60 = arith.constant 0 : index
    %124 = vector.load %arg17[%c0_59, %c0_60] : memref<1x8xf32, #tpu.memory_space<vmem>>, vector<1x8xf32>
    %125 = vector.broadcast %124 : vector<1x8xf32> to vector<8x8xf32>
    %126 = arith.addf %123, %125 : vector<8x8xf32>
    %cst_61 = arith.constant dense<0.000000e+00> : vector<8xf32>
    %127 = vector.multi_reduction <add>, %126, %cst_61 [0] : vector<8x8xf32> to vector<8xf32>
    %128 = vector.shape_cast %127 : vector<8xf32> to vector<1x8xf32>
    %cst_62 = arith.constant 8.000000e+00 : f32
    %129 = vector.broadcast %cst_62 : f32 to vector<1x8xf32>
    %130 = arith.divf %128, %129 : vector<1x8xf32>
    %131 = vector.broadcast %130 : vector<1x8xf32> to vector<8x8xf32>
    %132 = arith.subf %126, %131 : vector<8x8xf32>
    %133 = arith.mulf %132, %132 : vector<8x8xf32>
    %cst_63 = arith.constant dense<0.000000e+00> : vector<8xf32>
    %134 = vector.multi_reduction <add>, %133, %cst_63 [0] : vector<8x8xf32> to vector<8xf32>
    %135 = vector.shape_cast %134 : vector<8xf32> to vector<1x8xf32>
    %cst_64 = arith.constant 8.000000e+00 : f32
    %136 = vector.broadcast %cst_64 : f32 to vector<1x8xf32>
    %137 = arith.divf %135, %136 : vector<1x8xf32>
    %138 = vector.broadcast %130 : vector<1x8xf32> to vector<8x8xf32>
    %139 = arith.subf %126, %138 : vector<8x8xf32>
    %cst_65 = arith.constant 9.99999974E-6 : f32
    %140 = vector.broadcast %cst_65 : f32 to vector<1x8xf32>
    %141 = arith.addf %137, %140 : vector<1x8xf32>
    %142 = math.rsqrt %141 : vector<1x8xf32>
    %143 = vector.broadcast %142 : vector<1x8xf32> to vector<8x8xf32>
    %144 = arith.mulf %139, %143 : vector<8x8xf32>
    %c0_66 = arith.constant 0 : index
    %c0_67 = arith.constant 0 : index
    %145 = vector.load %arg18[%c0_66, %c0_67] : memref<1x8xf32, #tpu.memory_space<vmem>>, vector<1x8xf32>
    %146 = vector.broadcast %145 : vector<1x8xf32> to vector<8x8xf32>
    %147 = arith.mulf %144, %146 : vector<8x8xf32>
    %c0_68 = arith.constant 0 : index
    %c0_69 = arith.constant 0 : index
    %148 = vector.load %arg19[%c0_68, %c0_69] : memref<1x8xf32, #tpu.memory_space<vmem>>, vector<1x8xf32>
    %149 = vector.broadcast %148 : vector<1x8xf32> to vector<8x8xf32>
    %150 = arith.addf %147, %149 : vector<8x8xf32>
    %cst_70 = arith.constant 0.000000e+00 : f32
    %151 = vector.broadcast %cst_70 : f32 to vector<8x8xf32>
    %152 = arith.cmpf ogt, %150, %151 : vector<8x8xf32>
    %cst_71 = arith.constant 0.00999999977 : f32
    %153 = vector.broadcast %cst_71 : f32 to vector<8x8xf32>
    %154 = arith.mulf %153, %150 : vector<8x8xf32>
    %155 = arith.select %152, %150, %154 : vector<8x8xi1>, vector<8x8xf32>
    %c0_72 = arith.constant 0 : index
    %c0_73 = arith.constant 0 : index
    %156 = vector.load %arg20[%c0_72, %c0_73] : memref<8x32xf32, #tpu.memory_space<vmem>>, vector<8x32xf32>
    %cst_74 = arith.constant dense<0.000000e+00> : vector<8x32xf32>
    %157 = tpu.matmul %155, %156, %cst_74 {dimension_numbers = #tpu.dot_dimension_numbers<[1], [0], [0], [1], [0, 0, 1, 1], [], []>} : vector<8x8xf32>, vector<8x32xf32>, vector<8x32xf32> -> vector<8x32xf32>
    %c0_75 = arith.constant 0 : index
    %c0_76 = arith.constant 0 : index
    %158 = vector.load %arg21[%c0_75, %c0_76] : memref<1x32xf32, #tpu.memory_space<vmem>>, vector<1x32xf32>
    %159 = vector.broadcast %158 : vector<1x32xf32> to vector<8x32xf32>
    %160 = arith.addf %157, %159 : vector<8x32xf32>
    %161 = vector.extract_strided_slice %160 {offsets = [0, 0], sizes = [8, 16], strides = [1, 1]} : vector<8x32xf32> to vector<8x16xf32>
    %162 = vector.extract_strided_slice %160 {offsets = [0, 16], sizes = [8, 16], strides = [1, 1]} : vector<8x32xf32> to vector<8x16xf32>
    %cst_77 = arith.constant dense<0.000000e+00> : vector<16xf32>
    %163 = vector.multi_reduction <add>, %161, %cst_77 [0] : vector<8x16xf32> to vector<16xf32>
    %164 = vector.shape_cast %163 : vector<16xf32> to vector<1x16xf32>
    %cst_78 = arith.constant 8.000000e+00 : f32
    %165 = vector.broadcast %cst_78 : f32 to vector<1x16xf32>
    %166 = arith.divf %164, %165 : vector<1x16xf32>
    %167 = vector.broadcast %166 : vector<1x16xf32> to vector<8x16xf32>
    %168 = arith.subf %161, %167 : vector<8x16xf32>
    %169 = arith.mulf %168, %168 : vector<8x16xf32>
    %cst_79 = arith.constant dense<0.000000e+00> : vector<16xf32>
    %170 = vector.multi_reduction <add>, %169, %cst_79 [0] : vector<8x16xf32> to vector<16xf32>
    %171 = vector.shape_cast %170 : vector<16xf32> to vector<1x16xf32>
    %cst_80 = arith.constant 8.000000e+00 : f32
    %172 = vector.broadcast %cst_80 : f32 to vector<1x16xf32>
    %173 = arith.divf %171, %172 : vector<1x16xf32>
    %174 = vector.broadcast %166 : vector<1x16xf32> to vector<8x16xf32>
    %175 = arith.subf %161, %174 : vector<8x16xf32>
    %cst_81 = arith.constant 9.99999974E-6 : f32
    %176 = vector.broadcast %cst_81 : f32 to vector<1x16xf32>
    %177 = arith.addf %173, %176 : vector<1x16xf32>
    %178 = math.rsqrt %177 : vector<1x16xf32>
    %179 = vector.broadcast %178 : vector<1x16xf32> to vector<8x16xf32>
    %180 = arith.mulf %175, %179 : vector<8x16xf32>
    %c0_82 = arith.constant 0 : index
    %c0_83 = arith.constant 0 : index
    %181 = vector.load %arg22[%c0_82, %c0_83] : memref<1x16xf32, #tpu.memory_space<vmem>>, vector<1x16xf32>
    %182 = vector.broadcast %181 : vector<1x16xf32> to vector<8x16xf32>
    %183 = arith.mulf %180, %182 : vector<8x16xf32>
    %c0_84 = arith.constant 0 : index
    %c0_85 = arith.constant 0 : index
    %184 = vector.load %arg23[%c0_84, %c0_85] : memref<1x16xf32, #tpu.memory_space<vmem>>, vector<1x16xf32>
    %185 = vector.broadcast %184 : vector<1x16xf32> to vector<8x16xf32>
    %186 = arith.addf %183, %185 : vector<8x16xf32>
    %cst_86 = arith.constant 0.000000e+00 : f32
    %187 = vector.broadcast %cst_86 : f32 to vector<8x16xf32>
    %188 = arith.cmpf ogt, %186, %187 : vector<8x16xf32>
    %cst_87 = arith.constant 0.00999999977 : f32
    %189 = vector.broadcast %cst_87 : f32 to vector<8x16xf32>
    %190 = arith.mulf %189, %186 : vector<8x16xf32>
    %191 = arith.select %188, %186, %190 : vector<8x16xi1>, vector<8x16xf32>
    %192 = arith.addf %191, %162 : vector<8x16xf32>
    %c0_88 = arith.constant 0 : index
    %c0_89 = arith.constant 0 : index
    %193 = vector.load %arg24[%c0_88, %c0_89] : memref<16x64xf32, #tpu.memory_space<vmem>>, vector<16x64xf32>
    %cst_90 = arith.constant dense<0.000000e+00> : vector<8x64xf32>
    %194 = tpu.matmul %192, %193, %cst_90 {dimension_numbers = #tpu.dot_dimension_numbers<[1], [0], [0], [1], [0, 0, 1, 1], [], []>} : vector<8x16xf32>, vector<16x64xf32>, vector<8x64xf32> -> vector<8x64xf32>
    %c0_91 = arith.constant 0 : index
    %c0_92 = arith.constant 0 : index
    %195 = vector.load %arg25[%c0_91, %c0_92] : memref<1x64xf32, #tpu.memory_space<vmem>>, vector<1x64xf32>
    %196 = vector.broadcast %195 : vector<1x64xf32> to vector<8x64xf32>
    %197 = arith.addf %194, %196 : vector<8x64xf32>
    %198 = vector.extract_strided_slice %197 {offsets = [0, 0], sizes = [8, 32], strides = [1, 1]} : vector<8x64xf32> to vector<8x32xf32>
    %199 = vector.extract_strided_slice %197 {offsets = [0, 32], sizes = [8, 32], strides = [1, 1]} : vector<8x64xf32> to vector<8x32xf32>
    %cst_93 = arith.constant dense<0.000000e+00> : vector<32xf32>
    %200 = vector.multi_reduction <add>, %198, %cst_93 [0] : vector<8x32xf32> to vector<32xf32>
    %201 = vector.shape_cast %200 : vector<32xf32> to vector<1x32xf32>
    %cst_94 = arith.constant 8.000000e+00 : f32
    %202 = vector.broadcast %cst_94 : f32 to vector<1x32xf32>
    %203 = arith.divf %201, %202 : vector<1x32xf32>
    %204 = vector.broadcast %203 : vector<1x32xf32> to vector<8x32xf32>
    %205 = arith.subf %198, %204 : vector<8x32xf32>
    %206 = arith.mulf %205, %205 : vector<8x32xf32>
    %cst_95 = arith.constant dense<0.000000e+00> : vector<32xf32>
    %207 = vector.multi_reduction <add>, %206, %cst_95 [0] : vector<8x32xf32> to vector<32xf32>
    %208 = vector.shape_cast %207 : vector<32xf32> to vector<1x32xf32>
    %cst_96 = arith.constant 8.000000e+00 : f32
    %209 = vector.broadcast %cst_96 : f32 to vector<1x32xf32>
    %210 = arith.divf %208, %209 : vector<1x32xf32>
    %211 = vector.broadcast %203 : vector<1x32xf32> to vector<8x32xf32>
    %212 = arith.subf %198, %211 : vector<8x32xf32>
    %cst_97 = arith.constant 9.99999974E-6 : f32
    %213 = vector.broadcast %cst_97 : f32 to vector<1x32xf32>
    %214 = arith.addf %210, %213 : vector<1x32xf32>
    %215 = math.rsqrt %214 : vector<1x32xf32>
    %216 = vector.broadcast %215 : vector<1x32xf32> to vector<8x32xf32>
    %217 = arith.mulf %212, %216 : vector<8x32xf32>
    %c0_98 = arith.constant 0 : index
    %c0_99 = arith.constant 0 : index
    %218 = vector.load %arg26[%c0_98, %c0_99] : memref<1x32xf32, #tpu.memory_space<vmem>>, vector<1x32xf32>
    %219 = vector.broadcast %218 : vector<1x32xf32> to vector<8x32xf32>
    %220 = arith.mulf %217, %219 : vector<8x32xf32>
    %c0_100 = arith.constant 0 : index
    %c0_101 = arith.constant 0 : index
    %221 = vector.load %arg27[%c0_100, %c0_101] : memref<1x32xf32, #tpu.memory_space<vmem>>, vector<1x32xf32>
    %222 = vector.broadcast %221 : vector<1x32xf32> to vector<8x32xf32>
    %223 = arith.addf %220, %222 : vector<8x32xf32>
    %cst_102 = arith.constant 0.000000e+00 : f32
    %224 = vector.broadcast %cst_102 : f32 to vector<8x32xf32>
    %225 = arith.cmpf ogt, %223, %224 : vector<8x32xf32>
    %cst_103 = arith.constant 0.00999999977 : f32
    %226 = vector.broadcast %cst_103 : f32 to vector<8x32xf32>
    %227 = arith.mulf %226, %223 : vector<8x32xf32>
    %228 = arith.select %225, %223, %227 : vector<8x32xi1>, vector<8x32xf32>
    %229 = arith.addf %228, %199 : vector<8x32xf32>
    %c0_104 = arith.constant 0 : index
    %c0_105 = arith.constant 0 : index
    %230 = vector.load %arg28[%c0_104, %c0_105] : memref<32x32xf32, #tpu.memory_space<vmem>>, vector<32x32xf32>
    %cst_106 = arith.constant dense<0.000000e+00> : vector<8x32xf32>
    %231 = tpu.matmul %229, %230, %cst_106 {dimension_numbers = #tpu.dot_dimension_numbers<[1], [0], [0], [1], [0, 0, 1, 1], [], []>} : vector<8x32xf32>, vector<32x32xf32>, vector<8x32xf32> -> vector<8x32xf32>
    %c0_107 = arith.constant 0 : index
    %c0_108 = arith.constant 0 : index
    %232 = vector.load %arg29[%c0_107, %c0_108] : memref<1x32xf32, #tpu.memory_space<vmem>>, vector<1x32xf32>
    %233 = vector.broadcast %232 : vector<1x32xf32> to vector<8x32xf32>
    %234 = arith.addf %231, %233 : vector<8x32xf32>
    %c0_109 = arith.constant 0 : index
    %c0_110 = arith.constant 0 : index
    %235 = vector.load %arg30[%c0_109, %c0_110] : memref<8x32xf32, #tpu.memory_space<vmem>>, vector<8x32xf32>
    tpu.vector_store %arg30[%c0_109, %c0_110], %234 {strides = array<i32>} : memref<8x32xf32, #tpu.memory_space<vmem>>, vector<8x32xf32>,
    %c0_111 = arith.constant 0 : index
    %c0_112 = arith.constant 0 : index
    %236 = vector.load %arg31[%c0_111, %c0_112] : memref<8x16xf32, #tpu.memory_space<vmem>>, vector<8x16xf32>
    tpu.vector_store %arg31[%c0_111, %c0_112], %113 {strides = array<i32>} : memref<8x16xf32, #tpu.memory_space<vmem>>, vector<8x16xf32>,
    return
  }
}

</mosaic_0001>

<llo_original>
// kernel: tpu_custom_call.1
$region0: #{tpu_custom_call.1}
  #allocation0 [shape = 'u32[]', space=smem, size = 0x4, offset = 0x4, fixed_abs, tag = 'smem constant byte address 0x4 - core index']
  #allocation1 [shape = 'u32[144,128]{1,0:T(1,128)}', space=vmem, size = 0x12000, scoped, tag = 'internal scratch']
  %s0 = inlined_call_operand.smem [shape: u32[32], index: -1, kind: input, shape index: {}]
  %s1 = sld [smem:[%s0]]
  %s2 = scalar_lea.smem %s0, 1
  %s3 = sld [smem:[%s2]]
  %s4 = scalar_lea.smem %s0, 2
  %s5 = sld [smem:[%s4]]
  %s6 = scalar_lea.smem %s0, 3
  %s7 = sld [smem:[%s6]]
  %s8 = scalar_lea.smem %s0, 4
  %s9 = sld [smem:[%s8]]
  %s10 = scalar_lea.smem %s0, 5
  %s11 = sld [smem:[%s10]]
  %s12 = scalar_lea.smem %s0, 6
  %s13 = sld [smem:[%s12]]
  %s14 = scalar_lea.smem %s0, 7
  %s15 = sld [smem:[%s14]]
  %s16 = scalar_lea.smem %s0, 8
  %s17 = sld [smem:[%s16]]
  %s18 = scalar_lea.smem %s0, 9
  %s19 = sld [smem:[%s18]]
  %s20 = scalar_lea.smem %s0, 10
  %s21 = sld [smem:[%s20]]
  %s22 = scalar_lea.smem %s0, 11
  %s23 = sld [smem:[%s22]]
  %s24 = scalar_lea.smem %s0, 12
  %s25 = sld [smem:[%s24]]
  %s26 = scalar_lea.smem %s0, 13
  %s27 = sld [smem:[%s26]]
  %s28 = scalar_lea.smem %s0, 14
  %s29 = sld [smem:[%s28]]
  %s30 = scalar_lea.smem %s0, 15
  %s31 = sld [smem:[%s30]]
  %s32 = scalar_lea.smem %s0, 16
  %s33 = sld [smem:[%s32]]
  %s34 = scalar_lea.smem %s0, 17
  %s35 = sld [smem:[%s34]]
  %s36 = scalar_lea.smem %s0, 18
  %s37 = sld [smem:[%s36]]
  %s38 = scalar_lea.smem %s0, 19
  %s39 = sld [smem:[%s38]]
  %s40 = scalar_lea.smem %s0, 20
  %s41 = sld [smem:[%s40]]
  %s42 = scalar_lea.smem %s0, 21
  %s43 = sld [smem:[%s42]]
  %s44 = scalar_lea.smem %s0, 22
  %s45 = sld [smem:[%s44]]
  %s46 = scalar_lea.smem %s0, 23
  %s47 = sld [smem:[%s46]]
  %s48 = scalar_lea.smem %s0, 24
  %s49 = sld [smem:[%s48]]
  %s50 = scalar_lea.smem %s0, 25
  %s51 = sld [smem:[%s50]]
  %s52 = scalar_lea.smem %s0, 26
  %s53 = sld [smem:[%s52]]
  %s54 = scalar_lea.smem %s0, 27
  %s55 = sld [smem:[%s54]]
  %s56 = scalar_lea.smem %s0, 28
  %s57 = sld [smem:[%s56]]
  %s58 = scalar_lea.smem %s0, 29
  %s59 = sld [smem:[%s58]]
  %s60 = scalar_lea.smem %s0, 30
  %s61 = sld [smem:[%s60]]
  %s62 = scalar_lea.smem %s0, 31
  %s63 = sld [smem:[%s62]]
  %64 = xla_tuple %s61, %s63
  %s65 = sld [smem:[#allocation0]]
  $region206: #{tpu_custom_call.1} parent=0
    _
  %s67 = ssub.s32 1, %s65
  %s68 = scalar_select 0, %s67, %s65
  $region1: #{tpu_custom_call.1} parent=0
    #allocation2 [shape = 'u8[4096]{0}', space=vmem, size = 0x1000, scoped, tag = 'input window, operand 0, single buffered']
    #allocation3 [shape = 's32[1]{0}', space=sflag, size = 0x4, scoped, tag = 'scoped memory for tpu_custom_call.1']
    #allocation4 [shape = 's32[1]{0}', space=sflag, size = 0x4, scoped, tag = 'scoped memory for tpu_custom_call.1']
    #allocation5 [shape = 'u8[4096]{0}', space=vmem, size = 0x1000, scoped, tag = 'input window, operand 1, single buffered']
    #allocation6 [shape = 's32[1]{0}', space=sflag, size = 0x4, scoped, tag = 'scoped memory for tpu_custom_call.1']
    #allocation7 [shape = 'u8[16384]{0}', space=vmem, size = 0x4000, scoped, tag = 'input window, operand 2, single buffered']
    #allocation8 [shape = 'u8[512]{0}', space=vmem, size = 0x400, scoped, tag = 'input window, operand 3, single buffered']
    #allocation9 [shape = 's32[1]{0}', space=sflag, size = 0x4, scoped, tag = 'scoped memory for tpu_custom_call.1']
    #allocation10 [shape = 'u8[512]{0}', space=vmem, size = 0x400, scoped, tag = 'input window, operand 4, single buffered']
    #allocation11 [shape = 'u8[512]{0}', space=vmem, size = 0x400, scoped, tag = 'input window, operand 5, single buffered']
    #allocation12 [shape = 's32[1]{0}', space=sflag, size = 0x4, scoped, tag = 'scoped memory for tpu_custom_call.1']
    #allocation13 [shape = 'u8[16384]{0}', space=vmem, size = 0x4000, scoped, tag = 'input window, operand 6, single buffered']
    #allocation14 [shape = 'u8[512]{0}', space=vmem, size = 0x400, scoped, tag = 'input window, operand 7, single buffered']
    #allocation15 [shape = 's32[1]{0}', space=sflag, size = 0x4, scoped, tag = 'scoped memory for tpu_custom_call.1']
    #allocation16 [shape = 'u8[512]{0}', space=vmem, size = 0x400, scoped, tag = 'input window, operand 8, single buffered']
    #allocation17 [shape = 'u8[512]{0}', space=vmem, size = 0x400, scoped, tag = 'input window, operand 9, single buffered']
    #allocation18 [shape = 's32[1]{0}', space=sflag, size = 0x4, scoped, tag = 'scoped memory for tpu_custom_call.1']
    #allocation19 [shape = 'u8[512]{0}', space=vmem, size = 0x400, scoped, tag = 'input window, operand 11, single buffered']
    #allocation20 [shape = 'u8[512]{0}', space=vmem, size = 0x400, scoped, tag = 'input window, operand 12, single buffered']
    #allocation21 [shape = 's32[1]{0}', space=sflag, size = 0x4, scoped, tag = 'scoped memory for tpu_custom_call.1']
    #allocation22 [shape = 'u8[512]{0}', space=vmem, size = 0x400, scoped, tag = 'input window, operand 13, single buffered']
    #allocation23 [shape = 'u8[4096]{0}', space=vmem, size = 0x1000, scoped, tag = 'input window, operand 14, single buffered']
    #allocation24 [shape = 's32[1]{0}', space=sflag, size = 0x4, scoped, tag = 'scoped memory for tpu_custom_call.1']
    #allocation25 [shape = 'u8[512]{0}', space=vmem, size = 0x400, scoped, tag = 'input window, operand 15, single buffered']
    #allocation26 [shape = 'u8[4096]{0}', space=vmem, size = 0x1000, scoped, tag = 'input window, operand 16, single buffered']
    #allocation27 [shape = 's32[1]{0}', space=sflag, size = 0x4, scoped, tag = 'scoped memory for tpu_custom_call.1']
    #allocation28 [shape = 'u8[512]{0}', space=vmem, size = 0x400, scoped, tag = 'input window, operand 17, single buffered']
    #allocation29 [shape = 'u8[4096]{0}', space=vmem, size = 0x1000, scoped, tag = 'output window, operand 0, single buffered']
    #allocation30 [shape = 'u8[4096]{0}', space=vmem, size = 0x1000, scoped, tag = 'output window, operand 1, single buffered']
    #allocation31 [shape = 's32[1]{0}', space=sflag, size = 0x4, scoped, tag = 'scoped memory for tpu_custom_call.1']
    %69 = vsyncpa [#allocation3], 0
    %70 = vsyncpa [#allocation6], 0
    %71 = vsyncpa [#allocation9], 0
    %72 = vsyncpa [#allocation12], 0
    %73 = vsyncpa [#allocation15], 0
    %74 = vsyncpa [#allocation18], 0
    %75 = vsyncpa [#allocation21], 0
    %76 = vsyncpa [#allocation24], 0
    %77 = vsyncpa [#allocation27], 0
    %78 = vsyncpa [#allocation4], 0
    %79 = vsyncpa [#allocation31], 0
    // Predicated region
    $region2: #{tpu_custom_call.1} parent=1 // pred_check
      _
    $region3: #{tpu_custom_call.1} parent=1 // pred_check_branch
      %81 = sbr.rel (0) target = $region5
    $region4: #{tpu_custom_call.1} parent=1 // pred_region
      %s83 = ssub.s32 128, 128
      %84 = vsyncadd [#allocation3], %s83
      %s86 = sshll.u32 [#allocation2], 4
      %s87 = int_to_ptr.vmem [resolvable:$true] %s86
      %89 = dma.hbm_to_vmem [thread:$0]  %s1, 128, %s87, [#allocation3]
    $region5: #{tpu_custom_call.1} parent=1 // pred_fallthru
      _
    // Predicated region
    $region6: #{tpu_custom_call.1} parent=1 // pred_check
      _
    $region7: #{tpu_custom_call.1} parent=1 // pred_check_branch
      %91 = sbr.rel (0) target = $region9
    $region8: #{tpu_custom_call.1} parent=1 // pred_region
      %s93 = ssub.s32 128, 128
      %94 = vsyncadd [#allocation6], %s93
      %s96 = sshll.u32 [#allocation5], 4
      %s97 = int_to_ptr.vmem [resolvable:$true] %s96
      %99 = dma.hbm_to_vmem [thread:$0]  %s3, 128, %s97, [#allocation6]
    $region9: #{tpu_custom_call.1} parent=1 // pred_fallthru
      _
    // Predicated region
    $region10: #{tpu_custom_call.1} parent=1 // pred_check
      _
    $region11: #{tpu_custom_call.1} parent=1 // pred_check_branch
      %101 = sbr.rel (0) target = $region13
    $region12: #{tpu_custom_call.1} parent=1 // pred_region
      %s103 = ssub.s32 512, 512
      %104 = vsyncadd [#allocation6], %s103
      %s105 = sshll.u32 [#allocation7], 4
      %s106 = int_to_ptr.vmem [resolvable:$true] %s105
      %111 = dma.hbm_to_vmem [thread:$0]  %s5, 512, %s106, [#allocation6], 128, 128, 8
    $region13: #{tpu_custom_call.1} parent=1 // pred_fallthru
      _
    // Predicated region
    $region14: #{tpu_custom_call.1} parent=1 // pred_check
      _
    $region15: #{tpu_custom_call.1} parent=1 // pred_check_branch
      %113 = sbr.rel (0) target = $region17
    $region16: #{tpu_custom_call.1} parent=1 // pred_region
      %s115 = ssub.s32 16, 16
      %116 = vsyncadd [#allocation9], %s115
      %s118 = sshll.u32 [#allocation8], 4
      %s119 = int_to_ptr.vmem [resolvable:$true] %s118
      %121 = dma.hbm_to_vmem [thread:$0]  %s7, 16, %s119, [#allocation9]
    $region17: #{tpu_custom_call.1} parent=1 // pred_fallthru
      _
    // Predicated region
    $region18: #{tpu_custom_call.1} parent=1 // pred_check
      _
    $region19: #{tpu_custom_call.1} parent=1 // pred_check_branch
      %123 = sbr.rel (0) target = $region21
    $region20: #{tpu_custom_call.1} parent=1 // pred_region
      %s125 = ssub.s32 16, 16
      %126 = vsyncadd [#allocation9], %s125
      %s128 = sshll.u32 [#allocation10], 4
      %s129 = int_to_ptr.vmem [resolvable:$true] %s128
      %131 = dma.hbm_to_vmem [thread:$0]  %s9, 16, %s129, [#allocation9]
    $region21: #{tpu_custom_call.1} parent=1 // pred_fallthru
      _
    // Predicated region
    $region22: #{tpu_custom_call.1} parent=1 // pred_check
      _
    $region23: #{tpu_custom_call.1} parent=1 // pred_check_branch
      %133 = sbr.rel (0) target = $region25
    $region24: #{tpu_custom_call.1} parent=1 // pred_region
      %s135 = ssub.s32 16, 16
      %136 = vsyncadd [#allocation12], %s135
      %s138 = sshll.u32 [#allocation11], 4
      %s139 = int_to_ptr.vmem [resolvable:$true] %s138
      %141 = dma.hbm_to_vmem [thread:$0]  %s11, 16, %s139, [#allocation12]
    $region25: #{tpu_custom_call.1} parent=1 // pred_fallthru
      _
    // Predicated region
    $region26: #{tpu_custom_call.1} parent=1 // pred_check
      _
    $region27: #{tpu_custom_call.1} parent=1 // pred_check_branch
      %143 = sbr.rel (0) target = $region29
    $region28: #{tpu_custom_call.1} parent=1 // pred_region
      %s145 = ssub.s32 512, 512
      %146 = vsyncadd [#allocation12], %s145
      %s147 = sshll.u32 [#allocation13], 4
      %s148 = int_to_ptr.vmem [resolvable:$true] %s147
      %153 = dma.hbm_to_vmem [thread:$0]  %s13, 512, %s148, [#allocation12], 128, 128, 8
    $region29: #{tpu_custom_call.1} parent=1 // pred_fallthru
      _
    // Predicated region
    $region30: #{tpu_custom_call.1} parent=1 // pred_check
      _
    $region31: #{tpu_custom_call.1} parent=1 // pred_check_branch
      %155 = sbr.rel (0) target = $region33
    $region32: #{tpu_custom_call.1} parent=1 // pred_region
      %s157 = ssub.s32 16, 16
      %158 = vsyncadd [#allocation15], %s157
      %s160 = sshll.u32 [#allocation14], 4
      %s161 = int_to_ptr.vmem [resolvable:$true] %s160
      %163 = dma.hbm_to_vmem [thread:$0]  %s15, 16, %s161, [#allocation15]
    $region33: #{tpu_custom_call.1} parent=1 // pred_fallthru
      _
    // Predicated region
    $region34: #{tpu_custom_call.1} parent=1 // pred_check
      _
    $region35: #{tpu_custom_call.1} parent=1 // pred_check_branch
      %165 = sbr.rel (0) target = $region37
    $region36: #{tpu_custom_call.1} parent=1 // pred_region
      %s167 = ssub.s32 16, 16
      %168 = vsyncadd [#allocation15], %s167
      %s170 = sshll.u32 [#allocation16], 4
      %s171 = int_to_ptr.vmem [resolvable:$true] %s170
      %173 = dma.hbm_to_vmem [thread:$0]  %s17, 16, %s171, [#allocation15]
    $region37: #{tpu_custom_call.1} parent=1 // pred_fallthru
      _
    // Predicated region
    $region38: #{tpu_custom_call.1} parent=1 // pred_check
      _
    $region39: #{tpu_custom_call.1} parent=1 // pred_check_branch
      %175 = sbr.rel (0) target = $region41
    $region40: #{tpu_custom_call.1} parent=1 // pred_region
      %s177 = ssub.s32 16, 16
      %178 = vsyncadd [#allocation18], %s177
      %s180 = sshll.u32 [#allocation17], 4
      %s181 = int_to_ptr.vmem [resolvable:$true] %s180
      %183 = dma.hbm_to_vmem [thread:$0]  %s19, 16, %s181, [#allocation18]
    $region41: #{tpu_custom_call.1} parent=1 // pred_fallthru
      _
    // Predicated region
    $region42: #{tpu_custom_call.1} parent=1 // pred_check
      _
    $region43: #{tpu_custom_call.1} parent=1 // pred_check_branch
      %185 = sbr.rel (0) target = $region45
    $region44: #{tpu_custom_call.1} parent=1 // pred_region
      _
    $region45: #{tpu_custom_call.1} parent=1 // pred_fallthru
      _
    // Predicated region
    $region46: #{tpu_custom_call.1} parent=1 // pred_check
      _
    $region47: #{tpu_custom_call.1} parent=1 // pred_check_branch
      %187 = sbr.rel (0) target = $region49
    $region48: #{tpu_custom_call.1} parent=1 // pred_region
      %s189 = ssub.s32 16, 16
      %190 = vsyncadd [#allocation18], %s189
      %s192 = sshll.u32 [#allocation19], 4
      %s193 = int_to_ptr.vmem [resolvable:$true] %s192
      %195 = dma.hbm_to_vmem [thread:$0]  %s23, 16, %s193, [#allocation18]
    $region49: #{tpu_custom_call.1} parent=1 // pred_fallthru
      _
    // Predicated region
    $region50: #{tpu_custom_call.1} parent=1 // pred_check
      _
    $region51: #{tpu_custom_call.1} parent=1 // pred_check_branch
      %197 = sbr.rel (0) target = $region53
    $region52: #{tpu_custom_call.1} parent=1 // pred_region
      %s199 = ssub.s32 16, 16
      %200 = vsyncadd [#allocation21], %s199
      %s202 = sshll.u32 [#allocation20], 4
      %s203 = int_to_ptr.vmem [resolvable:$true] %s202
      %205 = dma.hbm_to_vmem [thread:$0]  %s25, 16, %s203, [#allocation21]
    $region53: #{tpu_custom_call.1} parent=1 // pred_fallthru
      _
    // Predicated region
    $region54: #{tpu_custom_call.1} parent=1 // pred_check
      _
    $region55: #{tpu_custom_call.1} parent=1 // pred_check_branch
      %207 = sbr.rel (0) target = $region57
    $region56: #{tpu_custom_call.1} parent=1 // pred_region
      %s209 = ssub.s32 16, 16
      %210 = vsyncadd [#allocation21], %s209
      %s212 = sshll.u32 [#allocation22], 4
      %s213 = int_to_ptr.vmem [resolvable:$true] %s212
      %215 = dma.hbm_to_vmem [thread:$0]  %s27, 16, %s213, [#allocation21]
    $region57: #{tpu_custom_call.1} parent=1 // pred_fallthru
      _
    // Predicated region
    $region58: #{tpu_custom_call.1} parent=1 // pred_check
      _
    $region59: #{tpu_custom_call.1} parent=1 // pred_check_branch
      %217 = sbr.rel (0) target = $region61
    $region60: #{tpu_custom_call.1} parent=1 // pred_region
      %s219 = ssub.s32 128, 128
      %220 = vsyncadd [#allocation24], %s219
      %s222 = sshll.u32 [#allocation23], 4
      %s223 = int_to_ptr.vmem [resolvable:$true] %s222
      %225 = dma.hbm_to_vmem [thread:$0]  %s29, 128, %s223, [#allocation24]
    $region61: #{tpu_custom_call.1} parent=1 // pred_fallthru
      _
    // Predicated region
    $region62: #{tpu_custom_call.1} parent=1 // pred_check
      _
    $region63: #{tpu_custom_call.1} parent=1 // pred_check_branch
      %227 = sbr.rel (0) target = $region65
    $region64: #{tpu_custom_call.1} parent=1 // pred_region
      %s229 = ssub.s32 16, 16
      %230 = vsyncadd [#allocation24], %s229
      %s232 = sshll.u32 [#allocation25], 4
      %s233 = int_to_ptr.vmem [resolvable:$true] %s232
      %235 = dma.hbm_to_vmem [thread:$0]  %s31, 16, %s233, [#allocation24]
    $region65: #{tpu_custom_call.1} parent=1 // pred_fallthru
      _
    // Predicated region
    $region66: #{tpu_custom_call.1} parent=1 // pred_check
      _
    $region67: #{tpu_custom_call.1} parent=1 // pred_check_branch
      %237 = sbr.rel (0) target = $region69
    $region68: #{tpu_custom_call.1} parent=1 // pred_region
      %s239 = ssub.s32 128, 128
      %240 = vsyncadd [#allocation27], %s239
      %s242 = sshll.u32 [#allocation26], 4
      %s243 = int_to_ptr.vmem [resolvable:$true] %s242
      %245 = dma.hbm_to_vmem [thread:$0]  %s33, 128, %s243, [#allocation27]
    $region69: #{tpu_custom_call.1} parent=1 // pred_fallthru
      _
    // Predicated region
    $region70: #{tpu_custom_call.1} parent=1 // pred_check
      _
    $region71: #{tpu_custom_call.1} parent=1 // pred_check_branch
      %247 = sbr.rel (0) target = $region73
    $region72: #{tpu_custom_call.1} parent=1 // pred_region
      %s249 = ssub.s32 16, 16
      %250 = vsyncadd [#allocation27], %s249
      %s252 = sshll.u32 [#allocation28], 4
      %s253 = int_to_ptr.vmem [resolvable:$true] %s252
      %255 = dma.hbm_to_vmem [thread:$0]  %s35, 16, %s253, [#allocation27]
    $region73: #{tpu_custom_call.1} parent=1 // pred_fallthru
      _
    // Predicated region
    $region74: #{tpu_custom_call.1} parent=1 // pred_check
      _
    $region75: #{tpu_custom_call.1} parent=1 // pred_check_branch
      %257 = sbr.rel (0) target = $region77
    $region76: #{tpu_custom_call.1} parent=1 // pred_region
      _
    $region77: #{tpu_custom_call.1} parent=1 // pred_fallthru
      _
    // Predicated region
    $region78: #{tpu_custom_call.1} parent=1 // pred_check
      _
    $region79: #{tpu_custom_call.1} parent=1 // pred_check_branch
      %259 = sbr.rel (0) target = $region81
    $region80: #{tpu_custom_call.1} parent=1 // pred_region
      _
    $region81: #{tpu_custom_call.1} parent=1 // pred_fallthru
      _
    // Predicated region
    $region82: #{tpu_custom_call.1} parent=1 // pred_check
      _
    $region83: #{tpu_custom_call.1} parent=1 // pred_check_branch
      %261 = sbr.rel (0) target = $region85
    $region84: #{tpu_custom_call.1} parent=1 // pred_region
      _
    $region85: #{tpu_custom_call.1} parent=1 // pred_fallthru
      _
    // Predicated region
    $region86: #{tpu_custom_call.1} parent=1 // pred_check
      _
    $region87: #{tpu_custom_call.1} parent=1 // pred_check_branch
      %263 = sbr.rel (0) target = $region89
    $region88: #{tpu_custom_call.1} parent=1 // pred_region
      _
    $region89: #{tpu_custom_call.1} parent=1 // pred_fallthru
      _
    // Predicated region
    $region90: #{tpu_custom_call.1} parent=1 // pred_check
      _
    $region91: #{tpu_custom_call.1} parent=1 // pred_check_branch
      %265 = sbr.rel (0) target = $region93
    $region92: #{tpu_custom_call.1} parent=1 // pred_region
      _
    $region93: #{tpu_custom_call.1} parent=1 // pred_fallthru
      _
    // Predicated region
    $region94: #{tpu_custom_call.1} parent=1 // pred_check
      _
    $region95: #{tpu_custom_call.1} parent=1 // pred_check_branch
      %267 = sbr.rel (0) target = $region97
    $region96: #{tpu_custom_call.1} parent=1 // pred_region
      _
    $region97: #{tpu_custom_call.1} parent=1 // pred_fallthru
      _
    // Predicated region
    $region98: #{tpu_custom_call.1} parent=1 // pred_check
      _
    $region99: #{tpu_custom_call.1} parent=1 // pred_check_branch
      %269 = sbr.rel (0) target = $region101
    $region100: #{tpu_custom_call.1} parent=1 // pred_region
      _
    $region101: #{tpu_custom_call.1} parent=1 // pred_fallthru
      _
    // Predicated region
    $region102: #{tpu_custom_call.1} parent=1 // pred_check
      _
    $region103: #{tpu_custom_call.1} parent=1 // pred_check_branch
      %271 = sbr.rel (0) target = $region105
    $region104: #{tpu_custom_call.1} parent=1 // pred_region
      _
    $region105: #{tpu_custom_call.1} parent=1 // pred_fallthru
      _
    // Predicated region
    $region106: #{tpu_custom_call.1} parent=1 // pred_check
      _
    $region107: #{tpu_custom_call.1} parent=1 // pred_check_branch
      %273 = sbr.rel (0) target = $region109
    $region108: #{tpu_custom_call.1} parent=1 // pred_region
      _
    $region109: #{tpu_custom_call.1} parent=1 // pred_fallthru
      _
    // Predicated region
    $region110: #{tpu_custom_call.1} parent=1 // pred_check
      _
    $region111: #{tpu_custom_call.1} parent=1 // pred_check_branch
      %275 = sbr.rel (0) target = $region113
    $region112: #{tpu_custom_call.1} parent=1 // pred_region
      _
    $region113: #{tpu_custom_call.1} parent=1 // pred_fallthru
      _
    // Predicated region
    $region114: #{tpu_custom_call.1} parent=1 // pred_check
      _
    $region115: #{tpu_custom_call.1} parent=1 // pred_check_branch
      %277 = sbr.rel (0) target = $region117
    $region116: #{tpu_custom_call.1} parent=1 // pred_region
      _
    $region117: #{tpu_custom_call.1} parent=1 // pred_fallthru
      _
    // Predicated region
    $region118: #{tpu_custom_call.1} parent=1 // pred_check
      _
    $region119: #{tpu_custom_call.1} parent=1 // pred_check_branch
      %279 = sbr.rel (0) target = $region121
    $region120: #{tpu_custom_call.1} parent=1 // pred_region
      _
    $region121: #{tpu_custom_call.1} parent=1 // pred_fallthru
      _
    // Predicated region
    $region122: #{tpu_custom_call.1} parent=1 // pred_check
      _
    $region123: #{tpu_custom_call.1} parent=1 // pred_check_branch
      %281 = sbr.rel (0) target = $region125
    $region124: #{tpu_custom_call.1} parent=1 // pred_region
      %282 = dma.done [#allocation3], 128
    $region125: #{tpu_custom_call.1} parent=1 // pred_fallthru
      _
    // Predicated region
    $region126: #{tpu_custom_call.1} parent=1 // pred_check
      _
    $region127: #{tpu_custom_call.1} parent=1 // pred_check_branch
      %284 = sbr.rel (0) target = $region129
    $region128: #{tpu_custom_call.1} parent=1 // pred_region
      %285 = dma.done [#allocation6], 128
    $region129: #{tpu_custom_call.1} parent=1 // pred_fallthru
      _
    // Predicated region
    $region130: #{tpu_custom_call.1} parent=1 // pred_check
      _
    $region131: #{tpu_custom_call.1} parent=1 // pred_check_branch
      %287 = sbr.rel (0) target = $region133
    $region132: #{tpu_custom_call.1} parent=1 // pred_region
      %288 = dma.done [#allocation6], 512
    $region133: #{tpu_custom_call.1} parent=1 // pred_fallthru
      _
    // Predicated region
    $region134: #{tpu_custom_call.1} parent=1 // pred_check
      _
    $region135: #{tpu_custom_call.1} parent=1 // pred_check_branch
      %290 = sbr.rel (0) target = $region137
    $region136: #{tpu_custom_call.1} parent=1 // pred_region
      %291 = dma.done [#allocation9], 16
    $region137: #{tpu_custom_call.1} parent=1 // pred_fallthru
      _
    // Predicated region
    $region138: #{tpu_custom_call.1} parent=1 // pred_check
      _
    $region139: #{tpu_custom_call.1} parent=1 // pred_check_branch
      %293 = sbr.rel (0) target = $region141
    $region140: #{tpu_custom_call.1} parent=1 // pred_region
      %294 = dma.done [#allocation9], 16
    $region141: #{tpu_custom_call.1} parent=1 // pred_fallthru
      _
    // Predicated region
    $region142: #{tpu_custom_call.1} parent=1 // pred_check
      _
    $region143: #{tpu_custom_call.1} parent=1 // pred_check_branch
      %296 = sbr.rel (0) target = $region145
    $region144: #{tpu_custom_call.1} parent=1 // pred_region
      %297 = dma.done [#allocation12], 16
    $region145: #{tpu_custom_call.1} parent=1 // pred_fallthru
      _
    // Predicated region
    $region146: #{tpu_custom_call.1} parent=1 // pred_check
      _
    $region147: #{tpu_custom_call.1} parent=1 // pred_check_branch
      %299 = sbr.rel (0) target = $region149
    $region148: #{tpu_custom_call.1} parent=1 // pred_region
      %300 = dma.done [#allocation12], 512
    $region149: #{tpu_custom_call.1} parent=1 // pred_fallthru
      _
    // Predicated region
    $region150: #{tpu_custom_call.1} parent=1 // pred_check
      _
    $region151: #{tpu_custom_call.1} parent=1 // pred_check_branch
      %302 = sbr.rel (0) target = $region153
    $region152: #{tpu_custom_call.1} parent=1 // pred_region
      %303 = dma.done [#allocation15], 16
    $region153: #{tpu_custom_call.1} parent=1 // pred_fallthru
      _
    // Predicated region
    $region154: #{tpu_custom_call.1} parent=1 // pred_check
      _
    $region155: #{tpu_custom_call.1} parent=1 // pred_check_branch
      %305 = sbr.rel (0) target = $region157
    $region156: #{tpu_custom_call.1} parent=1 // pred_region
      %306 = dma.done [#allocation15], 16
    $region157: #{tpu_custom_call.1} parent=1 // pred_fallthru
      _
    // Predicated region
    $region158: #{tpu_custom_call.1} parent=1 // pred_check
      _
    $region159: #{tpu_custom_call.1} parent=1 // pred_check_branch
      %308 = sbr.rel (0) target = $region161
    $region160: #{tpu_custom_call.1} parent=1 // pred_region
      %309 = dma.done [#allocation18], 16
    $region161: #{tpu_custom_call.1} parent=1 // pred_fallthru
      _
    // Predicated region
    $region162: #{tpu_custom_call.1} parent=1 // pred_check
      _
    $region163: #{tpu_custom_call.1} parent=1 // pred_check_branch
      %311 = sbr.rel (0) target = $region165
    $region164: #{tpu_custom_call.1} parent=1 // pred_region
      %312 = dma.done [#allocation18], 16
    $region165: #{tpu_custom_call.1} parent=1 // pred_fallthru
      _
    // Predicated region
    $region166: #{tpu_custom_call.1} parent=1 // pred_check
      _
    $region167: #{tpu_custom_call.1} parent=1 // pred_check_branch
      %314 = sbr.rel (0) target = $region169
    $region168: #{tpu_custom_call.1} parent=1 // pred_region
      %315 = dma.done [#allocation21], 16
    $region169: #{tpu_custom_call.1} parent=1 // pred_fallthru
      _
    // Predicated region
    $region170: #{tpu_custom_call.1} parent=1 // pred_check
      _
    $region171: #{tpu_custom_call.1} parent=1 // pred_check_branch
      %317 = sbr.rel (0) target = $region173
    $region172: #{tpu_custom_call.1} parent=1 // pred_region
      %318 = dma.done [#allocation21], 16
    $region173: #{tpu_custom_call.1} parent=1 // pred_fallthru
      _
    // Predicated region
    $region174: #{tpu_custom_call.1} parent=1 // pred_check
      _
    $region175: #{tpu_custom_call.1} parent=1 // pred_check_branch
      %320 = sbr.rel (0) target = $region177
    $region176: #{tpu_custom_call.1} parent=1 // pred_region
      %321 = dma.done [#allocation24], 128
    $region177: #{tpu_custom_call.1} parent=1 // pred_fallthru
      _
    // Predicated region
    $region178: #{tpu_custom_call.1} parent=1 // pred_check
      _
    $region179: #{tpu_custom_call.1} parent=1 // pred_check_branch
      %323 = sbr.rel (0) target = $region181
    $region180: #{tpu_custom_call.1} parent=1 // pred_region
      %324 = dma.done [#allocation24], 16
    $region181: #{tpu_custom_call.1} parent=1 // pred_fallthru
      _
    // Predicated region
    $region182: #{tpu_custom_call.1} parent=1 // pred_check
      _
    $region183: #{tpu_custom_call.1} parent=1 // pred_check_branch
      %326 = sbr.rel (0) target = $region185
    $region184: #{tpu_custom_call.1} parent=1 // pred_region
      %327 = dma.done [#allocation27], 128
    $region185: #{tpu_custom_call.1} parent=1 // pred_fallthru
      _
    // Predicated region
    $region186: #{tpu_custom_call.1} parent=1 // pred_check
      _
    $region187: #{tpu_custom_call.1} parent=1 // pred_check_branch
      %329 = sbr.rel (0) target = $region189
    $region188: #{tpu_custom_call.1} parent=1 // pred_region
      %330 = dma.done [#allocation27], 16
    $region189: #{tpu_custom_call.1} parent=1 // pred_fallthru
      _
    %v331 = vld [vmem:[#allocation2] sm:$0xff]
    %v332 = vld [vmem:[#allocation7] sm:$0xff]
    %v333 = vld [vmem:[#allocation7 + $0x8] sm:$0xff]
    %v334 = vld [vmem:[#allocation7 + $0x10] sm:$0xff]
    %v335 = vld [vmem:[#allocation7 + $0x18] sm:$0xff]
    %v336 = vld [vmem:[#allocation8] sm:$0x1]
    %v338 = vlaneseq
    %v339 = vshrl.u32 %v338, 7
    %v340 = vsub.s32 0, %v339
    %v341 = vrot.slane %v336, %v340
    %vm343 = vcmask 261120
    %v345 = vsel %vm343, %v331, 0
    %347 = vmatprep.subr.mxu0 0.0
    %348 = vmatpush1.msra.mxu0 %v332
    %349 = vmatprep.subr.mxu0 0.0
    %350 = vmatpush1.msra.mxu0 %v333
    %351 = vmatprep.subr.mxu0 0.0
    %352 = vmatpush1.msra.mxu0 %v334
    %353 = vmatprep.subr.mxu0 0.0
    %354 = vmatpush1.msra.mxu0 %v335
    %355 = vmatprep.subr.mxu0 0.0
    %356 = vmatpush1.msra.mxu0 0.0
    %357 = vmatprep.subr.mxu0 0.0
    %358 = vmatpush1.msra.mxu0 0.0
    %359 = vmatprep.subr.mxu0 0.0
    %360 = vmatpush1.msra.mxu0 0.0
    %361 = vmatprep.subr.mxu0 0.0
    %362 = vmatpush1.msra.mxu0 0.0
    %363 = vmatprep.subr.mxu0 0.0
    %364 = vmatpush1.msra.mxu0 0.0
    %365 = vmatprep.subr.mxu0 0.0
    %366 = vmatpush1.msra.mxu0 0.0
    %367 = vmatprep.subr.mxu0 0.0
    %368 = vmatpush1.msra.mxu0 0.0
    %369 = vmatprep.subr.mxu0 0.0
    %370 = vmatpush1.msra.mxu0 0.0
    %371 = vmatprep.subr.mxu0 0.0
    %372 = vmatpush1.msra.mxu0 0.0
    %373 = vmatprep.subr.mxu0 0.0
    %374 = vmatpush1.msra.mxu0 0.0
    %375 = vmatprep.subr.mxu0 0.0
    %376 = vmatpush1.msra.mxu0 0.0
    %377 = vmatprep.subr.mxu0 0.0
    %378 = vmatpush1.msra.mxu0 0.0
    %379 = vmatprep.subr.mxu0 0.0
    %380 = vmatpush1.msra.mxu0 0.0
    %381 = vmatprep.subr.mxu0 0.0
    %382 = vmatpush1.msra.mxu0 0.0
    %383 = vmatprep.subr.mxu0 0.0
    %384 = vmatpush1.msra.mxu0 0.0
    %385 = vmatprep.subr.mxu0 0.0
    %386 = vmatpush1.msra.mxu0 0.0
    %387 = vmatprep.subr.mxu0 0.0
    %388 = vmatpush1.msra.mxu0 0.0
    %389 = vmatprep.subr.mxu0 0.0
    %390 = vmatpush1.msra.mxu0 0.0
    %391 = vmatprep.subr.mxu0 0.0
    %392 = vmatpush1.msra.mxu0 0.0
    %393 = vmatprep.subr.mxu0 0.0
    %394 = vmatpush1.msra.mxu0 0.0
    %395 = vmatprep.subr.mxu0 0.0
    %396 = vmatpush1.msra.mxu0 0.0
    %397 = vmatprep.subr.mxu0 0.0
    %398 = vmatpush1.msra.mxu0 0.0
    %399 = vmatprep.subr.mxu0 0.0
    %400 = vmatpush1.msra.mxu0 0.0
    %401 = vmatprep.subr.mxu0 0.0
    %402 = vmatpush1.msra.mxu0 0.0
    %403 = vmatprep.subr.mxu0 0.0
    %404 = vmatpush1.msra.mxu0 0.0
    %405 = vmatprep.subr.mxu0 0.0
    %406 = vmatpush1.msra.mxu0 0.0
    %407 = vmatprep.subr.mxu0 0.0
    %408 = vmatpush1.msra.mxu0 0.0
    %409 = vmatprep.subr.mxu0 0.0
    %410 = vmatpush1.msra.mxu0 0.0
    %411 = vmatprep.mubr.f32.mxu0 0.0
    %412 = vmatmul.mubr.f32.gmra.mrb[0].mxu0 %v345
    %v413 = vpop.f32.mrb[0].mxu0
    %v414 = vadd.f32 %v341, %v413
    %v415 = vpop.f32.mrb[0].mxu0
    %416 = vdwg.mxu0
    %v417 = vsel %vm343, %v414, 0.0
    %v418 = vrot.slane %v417, 4
    %v419 = vadd.f32 %v417, %v418
    %v420 = vrot.slane %v419, 2
    %v421 = vadd.f32 %v419, %v420
    %v422 = vrot.slane %v421, 1
    %v423 = vadd.f32 %v421, %v422
    %v424 = vrcp.pop 8.0
    %v425 = vmul.f32 %v423, %v424
    %v426 = vsub.f32 %v414, %v425
    %v427 = vmul.f32 %v426, %v426
    %v428 = vsel %vm343, %v427, 0.0
    %v429 = vrot.slane %v428, 4
    %v430 = vadd.f32 %v428, %v429
    %v431 = vrot.slane %v430, 2
    %v432 = vadd.f32 %v430, %v431
    %v433 = vrot.slane %v432, 1
    %v434 = vadd.f32 %v432, %v433
    %v435 = vmul.f32 %v434, %v424
    %v436 = vadd.f32 %v435, 1e-05
    %v437 = vrsqrt.pop %v436
    %v438 = vmul.f32 %v426, %v437
    %v439 = vld [vmem:[#allocation10] sm:$0x1]
    %v441 = vlaneseq
    %v442 = vshrl.u32 %v441, 7
    %v443 = vsub.s32 0, %v442
    %v444 = vrot.slane %v439, %v443
    %v446 = vmul.f32 %v438, %v444
    %v447 = vld [vmem:[#allocation11] sm:$0x1]
    %v449 = vlaneseq
    %v450 = vshrl.u32 %v449, 7
    %v451 = vsub.s32 0, %v450
    %v452 = vrot.slane %v447, %v451
    %v454 = vadd.f32 %v446, %v452
    %vm455 = vcmp.gt.f32.partialorder %v454, 0.0
    %v456 = vmul.f32 %v454, 0.01
    %v457 = vsel %vm455, %v454, %v456
    %v458 = vld [vmem:[#allocation13] sm:$0xff]
    %v459 = vld [vmem:[#allocation13 + $0x8] sm:$0xff]
    %v460 = vld [vmem:[#allocation13 + $0x10] sm:$0xff]
    %v461 = vld [vmem:[#allocation13 + $0x18] sm:$0xff]
    %v462 = vld [vmem:[#allocation14] sm:$0x1]
    %v464 = vlaneseq
    %v465 = vshrl.u32 %v464, 7
    %v466 = vsub.s32 0, %v465
    %v467 = vrot.slane %v462, %v466
    %v470 = vsel %vm343, %v457, 0
    %472 = vmatprep.subr.mxu0 0.0
    %473 = vmatpush1.msra.mxu0 %v458
    %474 = vmatprep.subr.mxu0 0.0
    %475 = vmatpush1.msra.mxu0 %v459
    %476 = vmatprep.subr.mxu0 0.0
    %477 = vmatpush1.msra.mxu0 %v460
    %478 = vmatprep.subr.mxu0 0.0
    %479 = vmatpush1.msra.mxu0 %v461
    %480 = vmatprep.subr.mxu0 0.0
    %481 = vmatpush1.msra.mxu0 0.0
    %482 = vmatprep.subr.mxu0 0.0
    %483 = vmatpush1.msra.mxu0 0.0
    %484 = vmatprep.subr.mxu0 0.0
    %485 = vmatpush1.msra.mxu0 0.0
    %486 = vmatprep.subr.mxu0 0.0
    %487 = vmatpush1.msra.mxu0 0.0
    %488 = vmatprep.subr.mxu0 0.0
    %489 = vmatpush1.msra.mxu0 0.0
    %490 = vmatprep.subr.mxu0 0.0
    %491 = vmatpush1.msra.mxu0 0.0
    %492 = vmatprep.subr.mxu0 0.0
    %493 = vmatpush1.msra.mxu0 0.0
    %494 = vmatprep.subr.mxu0 0.0
    %495 = vmatpush1.msra.mxu0 0.0
    %496 = vmatprep.subr.mxu0 0.0
    %497 = vmatpush1.msra.mxu0 0.0
    %498 = vmatprep.subr.mxu0 0.0
    %499 = vmatpush1.msra.mxu0 0.0
    %500 = vmatprep.subr.mxu0 0.0
    %501 = vmatpush1.msra.mxu0 0.0
    %502 = vmatprep.subr.mxu0 0.0
    %503 = vmatpush1.msra.mxu0 0.0
    %504 = vmatprep.subr.mxu0 0.0
    %505 = vmatpush1.msra.mxu0 0.0
    %506 = vmatprep.subr.mxu0 0.0
    %507 = vmatpush1.msra.mxu0 0.0
    %508 = vmatprep.subr.mxu0 0.0
    %509 = vmatpush1.msra.mxu0 0.0
    %510 = vmatprep.subr.mxu0 0.0
    %511 = vmatpush1.msra.mxu0 0.0
    %512 = vmatprep.subr.mxu0 0.0
    %513 = vmatpush1.msra.mxu0 0.0
    %514 = vmatprep.subr.mxu0 0.0
    %515 = vmatpush1.msra.mxu0 0.0
    %516 = vmatprep.subr.mxu0 0.0
    %517 = vmatpush1.msra.mxu0 0.0
    %518 = vmatprep.subr.mxu0 0.0
    %519 = vmatpush1.msra.mxu0 0.0
    %520 = vmatprep.subr.mxu0 0.0
    %521 = vmatpush1.msra.mxu0 0.0
    %522 = vmatprep.subr.mxu0 0.0
    %523 = vmatpush1.msra.mxu0 0.0
    %524 = vmatprep.subr.mxu0 0.0
    %525 = vmatpush1.msra.mxu0 0.0
    %526 = vmatprep.subr.mxu0 0.0
    %527 = vmatpush1.msra.mxu0 0.0
    %528 = vmatprep.subr.mxu0 0.0
    %529 = vmatpush1.msra.mxu0 0.0
    %530 = vmatprep.subr.mxu0 0.0
    %531 = vmatpush1.msra.mxu0 0.0
    %532 = vmatprep.subr.mxu0 0.0
    %533 = vmatpush1.msra.mxu0 0.0
    %534 = vmatprep.subr.mxu0 0.0
    %535 = vmatpush1.msra.mxu0 0.0
    %536 = vmatprep.mubr.f32.mxu0 0.0
    %537 = vmatmul.mubr.f32.gmra.mrb[0].mxu0 %v470
    %v538 = vpop.f32.mrb[0].mxu0
    %v539 = vadd.f32 %v467, %v538
    %v540 = vpop.f32.mrb[0].mxu0
    %541 = vdwg.mxu0
    %vm542 = vcmask 130048
    %v543 = vsel %vm542, %v539, 0.0
    %v544 = vrot.slane %v543, 4
    %v545 = vadd.f32 %v543, %v544
    %v546 = vrot.slane %v545, 2
    %v547 = vadd.f32 %v545, %v546
    %v548 = vrot.slane %v547, 1
    %v549 = vadd.f32 %v547, %v548
    %v550 = vmul.f32 %v549, %v424
    %v551 = vsub.f32 %v539, %v550
    %v552 = vmul.f32 %v551, %v551
    %v553 = vsel %vm542, %v552, 0.0
    %v554 = vrot.slane %v553, 4
    %v555 = vadd.f32 %v553, %v554
    %v556 = vrot.slane %v555, 2
    %v557 = vadd.f32 %v555, %v556
    %v558 = vrot.slane %v557, 1
    %v559 = vadd.f32 %v557, %v558
    %v560 = vmul.f32 %v559, %v424
    %v561 = vadd.f32 %v560, 1e-05
    %v562 = vrsqrt.pop %v561
    %v563 = vmul.f32 %v551, %v562
    %v564 = vld [vmem:[#allocation16] sm:$0x1]
    %v566 = vlaneseq
    %v567 = vshrl.u32 %v566, 7
    %v568 = vsub.s32 0, %v567
    %v569 = vrot.slane %v564, %v568
    %v571 = vmul.f32 %v563, %v569
    %v572 = vld [vmem:[#allocation17] sm:$0x1]
    %v574 = vlaneseq
    %v575 = vshrl.u32 %v574, 7
    %v576 = vsub.s32 0, %v575
    %v577 = vrot.slane %v572, %v576
    %v579 = vadd.f32 %v571, %v577
    %vm580 = vcmp.gt.f32.partialorder %v579, 0.0
    %v581 = vmul.f32 %v579, 0.01
    %v582 = vsel %vm580, %v579, %v581
    %584 = vrot.lane.b32.xlu0 %v539, 112
    %v585 = vpop.permute.xlu0 %584
    %v587 = vadd.f32 %v582, %v585
    %v588 = vld [vmem:[%s21] sm:$0xff]
    %v589 = vld [vmem:[%s21 + $0x8] sm:$0xff]
    %v590 = vld [vmem:[#allocation19] sm:$0x1]
    %v592 = vlaneseq
    %v593 = vshrl.u32 %v592, 7
    %v594 = vsub.s32 0, %v593
    %v595 = vrot.slane %v590, %v594
    %v598 = vsel %vm542, %v587, 0
    %600 = vmatprep.subr.mxu0 0.0
    %601 = vmatpush1.msra.mxu0 %v588
    %602 = vmatprep.subr.mxu0 0.0
    %603 = vmatpush1.msra.mxu0 %v589
    %604 = vmatprep.subr.mxu0 0.0
    %605 = vmatpush1.msra.mxu0 0.0
    %606 = vmatprep.subr.mxu0 0.0
    %607 = vmatpush1.msra.mxu0 0.0
    %608 = vmatprep.subr.mxu0 0.0
    %609 = vmatpush1.msra.mxu0 0.0
    %610 = vmatprep.subr.mxu0 0.0
    %611 = vmatpush1.msra.mxu0 0.0
    %612 = vmatprep.subr.mxu0 0.0
    %613 = vmatpush1.msra.mxu0 0.0
    %614 = vmatprep.subr.mxu0 0.0
    %615 = vmatpush1.msra.mxu0 0.0
    %616 = vmatprep.subr.mxu0 0.0
    %617 = vmatpush1.msra.mxu0 0.0
    %618 = vmatprep.subr.mxu0 0.0
    %619 = vmatpush1.msra.mxu0 0.0
    %620 = vmatprep.subr.mxu0 0.0
    %621 = vmatpush1.msra.mxu0 0.0
    %622 = vmatprep.subr.mxu0 0.0
    %623 = vmatpush1.msra.mxu0 0.0
    %624 = vmatprep.subr.mxu0 0.0
    %625 = vmatpush1.msra.mxu0 0.0
    %626 = vmatprep.subr.mxu0 0.0
    %627 = vmatpush1.msra.mxu0 0.0
    %628 = vmatprep.subr.mxu0 0.0
    %629 = vmatpush1.msra.mxu0 0.0
    %630 = vmatprep.subr.mxu0 0.0
    %631 = vmatpush1.msra.mxu0 0.0
    %632 = vmatprep.subr.mxu0 0.0
    %633 = vmatpush1.msra.mxu0 0.0
    %634 = vmatprep.subr.mxu0 0.0
    %635 = vmatpush1.msra.mxu0 0.0
    %636 = vmatprep.subr.mxu0 0.0
    %637 = vmatpush1.msra.mxu0 0.0
    %638 = vmatprep.subr.mxu0 0.0
    %639 = vmatpush1.msra.mxu0 0.0
    %640 = vmatprep.subr.mxu0 0.0
    %641 = vmatpush1.msra.mxu0 0.0
    %642 = vmatprep.subr.mxu0 0.0
    %643 = vmatpush1.msra.mxu0 0.0
    %644 = vmatprep.subr.mxu0 0.0
    %645 = vmatpush1.msra.mxu0 0.0
    %646 = vmatprep.subr.mxu0 0.0
    %647 = vmatpush1.msra.mxu0 0.0
    %648 = vmatprep.subr.mxu0 0.0
    %649 = vmatpush1.msra.mxu0 0.0
    %650 = vmatprep.subr.mxu0 0.0
    %651 = vmatpush1.msra.mxu0 0.0
    %652 = vmatprep.subr.mxu0 0.0
    %653 = vmatpush1.msra.mxu0 0.0
    %654 = vmatprep.subr.mxu0 0.0
    %655 = vmatpush1.msra.mxu0 0.0
    %656 = vmatprep.subr.mxu0 0.0
    %657 = vmatpush1.msra.mxu0 0.0
    %658 = vmatprep.subr.mxu0 0.0
    %659 = vmatpush1.msra.mxu0 0.0
    %660 = vmatprep.subr.mxu0 0.0
    %661 = vmatpush1.msra.mxu0 0.0
    %662 = vmatprep.subr.mxu0 0.0
    %663 = vmatpush1.msra.mxu0 0.0
    %664 = vmatprep.mubr.f32.mxu0 0.0
    %665 = vmatmul.mubr.f32.gmra.mrb[0].mxu0 %v598
    %v666 = vpop.f32.mrb[0].mxu0
    %v667 = vadd.f32 %v595, %v666
    %v668 = vpop.f32.mrb[0].mxu0
    %669 = vdwg.mxu0
    %vm670 = vcmask 64512
    %v671 = vsel %vm670, %v667, 0.0
    %v672 = vrot.slane %v671, 4
    %v673 = vadd.f32 %v671, %v672
    %v674 = vrot.slane %v673, 2
    %v675 = vadd.f32 %v673, %v674
    %v676 = vrot.slane %v675, 1
    %v677 = vadd.f32 %v675, %v676
    %v678 = vmul.f32 %v677, %v424
    %v679 = vsub.f32 %v667, %v678
    %v680 = vmul.f32 %v679, %v679
    %v681 = vsel %vm670, %v680, 0.0
    %v682 = vrot.slane %v681, 4
    %v683 = vadd.f32 %v681, %v682
    %v684 = vrot.slane %v683, 2
    %v685 = vadd.f32 %v683, %v684
    %v686 = vrot.slane %v685, 1
    %v687 = vadd.f32 %v685, %v686
    %v688 = vmul.f32 %v687, %v424
    %v689 = vadd.f32 %v688, 1e-05
    %v690 = vrsqrt.pop %v689
    %v691 = vmul.f32 %v679, %v690
    %v692 = vld [vmem:[#allocation20] sm:$0x1]
    %v694 = vlaneseq
    %v695 = vshrl.u32 %v694, 7
    %v696 = vsub.s32 0, %v695
    %v697 = vrot.slane %v692, %v696
    %v699 = vmul.f32 %v691, %v697
    %v700 = vld [vmem:[#allocation22] sm:$0x1]
    %v702 = vlaneseq
    %v703 = vshrl.u32 %v702, 7
    %v704 = vsub.s32 0, %v703
    %v705 = vrot.slane %v700, %v704
    %v707 = vadd.f32 %v699, %v705
    %vm708 = vcmp.gt.f32.partialorder %v707, 0.0
    %v709 = vmul.f32 %v707, 0.01
    %v710 = vsel %vm708, %v707, %v709
    %712 = vrot.lane.b32.xlu0 %v667, 120
    %v713 = vpop.permute.xlu0 %712
    %v715 = vadd.f32 %v710, %v713
    %v716 = vld [vmem:[#allocation23] sm:$0xff]
    %v717 = vld [vmem:[#allocation25] sm:$0x1]
    %v719 = vlaneseq
    %v720 = vshrl.u32 %v719, 7
    %v721 = vsub.s32 0, %v720
    %v722 = vrot.slane %v717, %v721
    %v725 = vsel %vm670, %v715, 0
    %727 = vmatprep.subr.mxu0 0.0
    %728 = vmatpush1.msra.mxu0 %v716
    %729 = vmatprep.subr.mxu0 0.0
    %730 = vmatpush1.msra.mxu0 0.0
    %731 = vmatprep.subr.mxu0 0.0
    %732 = vmatpush1.msra.mxu0 0.0
    %733 = vmatprep.subr.mxu0 0.0
    %734 = vmatpush1.msra.mxu0 0.0
    %735 = vmatprep.subr.mxu0 0.0
    %736 = vmatpush1.msra.mxu0 0.0
    %737 = vmatprep.subr.mxu0 0.0
    %738 = vmatpush1.msra.mxu0 0.0
    %739 = vmatprep.subr.mxu0 0.0
    %740 = vmatpush1.msra.mxu0 0.0
    %741 = vmatprep.subr.mxu0 0.0
    %742 = vmatpush1.msra.mxu0 0.0
    %743 = vmatprep.subr.mxu0 0.0
    %744 = vmatpush1.msra.mxu0 0.0
    %745 = vmatprep.subr.mxu0 0.0
    %746 = vmatpush1.msra.mxu0 0.0
    %747 = vmatprep.subr.mxu0 0.0
    %748 = vmatpush1.msra.mxu0 0.0
    %749 = vmatprep.subr.mxu0 0.0
    %750 = vmatpush1.msra.mxu0 0.0
    %751 = vmatprep.subr.mxu0 0.0
    %752 = vmatpush1.msra.mxu0 0.0
    %753 = vmatprep.subr.mxu0 0.0
    %754 = vmatpush1.msra.mxu0 0.0
    %755 = vmatprep.subr.mxu0 0.0
    %756 = vmatpush1.msra.mxu0 0.0
    %757 = vmatprep.subr.mxu0 0.0
    %758 = vmatpush1.msra.mxu0 0.0
    %759 = vmatprep.subr.mxu0 0.0
    %760 = vmatpush1.msra.mxu0 0.0
    %761 = vmatprep.subr.mxu0 0.0
    %762 = vmatpush1.msra.mxu0 0.0
    %763 = vmatprep.subr.mxu0 0.0
    %764 = vmatpush1.msra.mxu0 0.0
    %765 = vmatprep.subr.mxu0 0.0
    %766 = vmatpush1.msra.mxu0 0.0
    %767 = vmatprep.subr.mxu0 0.0
    %768 = vmatpush1.msra.mxu0 0.0
    %769 = vmatprep.subr.mxu0 0.0
    %770 = vmatpush1.msra.mxu0 0.0
    %771 = vmatprep.subr.mxu0 0.0
    %772 = vmatpush1.msra.mxu0 0.0
    %773 = vmatprep.subr.mxu0 0.0
    %774 = vmatpush1.msra.mxu0 0.0
    %775 = vmatprep.subr.mxu0 0.0
    %776 = vmatpush1.msra.mxu0 0.0
    %777 = vmatprep.subr.mxu0 0.0
    %778 = vmatpush1.msra.mxu0 0.0
    %779 = vmatprep.subr.mxu0 0.0
    %780 = vmatpush1.msra.mxu0 0.0
    %781 = vmatprep.subr.mxu0 0.0
    %782 = vmatpush1.msra.mxu0 0.0
    %783 = vmatprep.subr.mxu0 0.0
    %784 = vmatpush1.msra.mxu0 0.0
    %785 = vmatprep.subr.mxu0 0.0
    %786 = vmatpush1.msra.mxu0 0.0
    %787 = vmatprep.subr.mxu0 0.0
    %788 = vmatpush1.msra.mxu0 0.0
    %789 = vmatprep.subr.mxu0 0.0
    %790 = vmatpush1.msra.mxu0 0.0
    %791 = vmatprep.mubr.f32.mxu0 0.0
    %792 = vmatmul.mubr.f32.gmra.mrb[0].mxu0 %v725
    %v793 = vpop.f32.mrb[0].mxu0
    %v794 = vadd.f32 %v722, %v793
    %v795 = vpop.f32.mrb[0].mxu0
    %796 = vdwg.mxu0
    %v797 = vld [vmem:[#allocation5] sm:$0xff]
    %v798 = vmul.f32 %v794, 0.5
    %v799 = vmul.f32 %v798, 1.442695
    %v800 = vpow.pop %v799
    %802 = vrot.lane.b32.xlu0 %v800, 120
    %v803 = vpop.permute.xlu0 %802
    %v805 = vmul.f32 %v797, %v803
    %v806 = vadd.f32 %v794, %v805
    %v807 = vld [vmem:[#allocation26] sm:$0xff]
    %v808 = vld [vmem:[#allocation28] sm:$0x1]
    %v810 = vlaneseq
    %v811 = vshrl.u32 %v810, 7
    %v812 = vsub.s32 0, %v811
    %v813 = vrot.slane %v808, %v812
    %v816 = vsel %vm670, %v806, 0
    %818 = vmatprep.subr.mxu0 0.0
    %819 = vmatpush1.msra.mxu0 %v807
    %820 = vmatprep.subr.mxu0 0.0
    %821 = vmatpush1.msra.mxu0 0.0
    %822 = vmatprep.subr.mxu0 0.0
    %823 = vmatpush1.msra.mxu0 0.0
    %824 = vmatprep.subr.mxu0 0.0
    %825 = vmatpush1.msra.mxu0 0.0
    %826 = vmatprep.subr.mxu0 0.0
    %827 = vmatpush1.msra.mxu0 0.0
    %828 = vmatprep.subr.mxu0 0.0
    %829 = vmatpush1.msra.mxu0 0.0
    %830 = vmatprep.subr.mxu0 0.0
    %831 = vmatpush1.msra.mxu0 0.0
    %832 = vmatprep.subr.mxu0 0.0
    %833 = vmatpush1.msra.mxu0 0.0
    %834 = vmatprep.subr.mxu0 0.0
    %835 = vmatpush1.msra.mxu0 0.0
    %836 = vmatprep.subr.mxu0 0.0
    %837 = vmatpush1.msra.mxu0 0.0
    %838 = vmatprep.subr.mxu0 0.0
    %839 = vmatpush1.msra.mxu0 0.0
    %840 = vmatprep.subr.mxu0 0.0
    %841 = vmatpush1.msra.mxu0 0.0
    %842 = vmatprep.subr.mxu0 0.0
    %843 = vmatpush1.msra.mxu0 0.0
    %844 = vmatprep.subr.mxu0 0.0
    %845 = vmatpush1.msra.mxu0 0.0
    %846 = vmatprep.subr.mxu0 0.0
    %847 = vmatpush1.msra.mxu0 0.0
    %848 = vmatprep.subr.mxu0 0.0
    %849 = vmatpush1.msra.mxu0 0.0
    %850 = vmatprep.subr.mxu0 0.0
    %851 = vmatpush1.msra.mxu0 0.0
    %852 = vmatprep.subr.mxu0 0.0
    %853 = vmatpush1.msra.mxu0 0.0
    %854 = vmatprep.subr.mxu0 0.0
    %855 = vmatpush1.msra.mxu0 0.0
    %856 = vmatprep.subr.mxu0 0.0
    %857 = vmatpush1.msra.mxu0 0.0
    %858 = vmatprep.subr.mxu0 0.0
    %859 = vmatpush1.msra.mxu0 0.0
    %860 = vmatprep.subr.mxu0 0.0
    %861 = vmatpush1.msra.mxu0 0.0
    %862 = vmatprep.subr.mxu0 0.0
    %863 = vmatpush1.msra.mxu0 0.0
    %864 = vmatprep.subr.mxu0 0.0
    %865 = vmatpush1.msra.mxu0 0.0
    %866 = vmatprep.subr.mxu0 0.0
    %867 = vmatpush1.msra.mxu0 0.0
    %868 = vmatprep.subr.mxu0 0.0
    %869 = vmatpush1.msra.mxu0 0.0
    %870 = vmatprep.subr.mxu0 0.0
    %871 = vmatpush1.msra.mxu0 0.0
    %872 = vmatprep.subr.mxu0 0.0
    %873 = vmatpush1.msra.mxu0 0.0
    %874 = vmatprep.subr.mxu0 0.0
    %875 = vmatpush1.msra.mxu0 0.0
    %876 = vmatprep.subr.mxu0 0.0
    %877 = vmatpush1.msra.mxu0 0.0
    %878 = vmatprep.subr.mxu0 0.0
    %879 = vmatpush1.msra.mxu0 0.0
    %880 = vmatprep.subr.mxu0 0.0
    %881 = vmatpush1.msra.mxu0 0.0
    %882 = vmatprep.mubr.f32.mxu0 0.0
    %883 = vmatmul.mubr.f32.gmra.mrb[0].mxu0 %v816
    %v884 = vpop.f32.mrb[0].mxu0
    %v885 = vadd.f32 %v813, %v884
    %v886 = vpop.f32.mrb[0].mxu0
    %887 = vdwg.mxu0
    %v888 = vsel %vm670, %v885, 0.0
    %v889 = vrot.slane %v888, 4
    %v890 = vadd.f32 %v888, %v889
    %v891 = vrot.slane %v890, 2
    %v892 = vadd.f32 %v890, %v891
    %v893 = vrot.slane %v892, 1
    %v894 = vadd.f32 %v892, %v893
    %v895 = vmul.f32 %v894, %v424
    %v896 = vsub.f32 %v885, %v895
    %v897 = vmul.f32 %v896, %v896
    %v898 = vsel %vm670, %v897, 0.0
    %v899 = vrot.slane %v898, 4
    %v900 = vadd.f32 %v898, %v899
    %v901 = vrot.slane %v900, 2
    %v902 = vadd.f32 %v900, %v901
    %v903 = vrot.slane %v902, 1
    %v904 = vadd.f32 %v902, %v903
    %v905 = vmul.f32 %v904, %v424
    %v906 = vadd.f32 %v905, 1e-05
    %v907 = vrsqrt.pop %v906
    %v908 = vmul.f32 %v896, %v907
    %v909 = vld [vmem:[%s37] sm:$0x1]
    %v911 = vlaneseq
    %v912 = vshrl.u32 %v911, 7
    %v913 = vsub.s32 0, %v912
    %v914 = vrot.slane %v909, %v913
    %v916 = vmul.f32 %v908, %v914
    %v917 = vld [vmem:[%s39] sm:$0x1]
    %v919 = vlaneseq
    %v920 = vshrl.u32 %v919, 7
    %v921 = vsub.s32 0, %v920
    %v922 = vrot.slane %v917, %v921
    %v924 = vadd.f32 %v916, %v922
    %vm925 = vcmp.gt.f32.partialorder %v924, 0.0
    %v926 = vmul.f32 %v924, 0.01
    %v927 = vsel %vm925, %v924, %v926
    %v928 = vld [vmem:[%s41] sm:$0xff]
    %v929 = vld [vmem:[%s43] sm:$0x1]
    %v931 = vlaneseq
    %v932 = vshrl.u32 %v931, 7
    %v933 = vsub.s32 0, %v932
    %v934 = vrot.slane %v929, %v933
    %v937 = vsel %vm670, %v927, 0
    %939 = vmatprep.subr.mxu0 0.0
    %940 = vmatpush1.msra.mxu0 %v928
    %941 = vmatprep.subr.mxu0 0.0
    %942 = vmatpush1.msra.mxu0 0.0
    %943 = vmatprep.subr.mxu0 0.0
    %944 = vmatpush1.msra.mxu0 0.0
    %945 = vmatprep.subr.mxu0 0.0
    %946 = vmatpush1.msra.mxu0 0.0
    %947 = vmatprep.subr.mxu0 0.0
    %948 = vmatpush1.msra.mxu0 0.0
    %949 = vmatprep.subr.mxu0 0.0
    %950 = vmatpush1.msra.mxu0 0.0
    %951 = vmatprep.subr.mxu0 0.0
    %952 = vmatpush1.msra.mxu0 0.0
    %953 = vmatprep.subr.mxu0 0.0
    %954 = vmatpush1.msra.mxu0 0.0
    %955 = vmatprep.subr.mxu0 0.0
    %956 = vmatpush1.msra.mxu0 0.0
    %957 = vmatprep.subr.mxu0 0.0
    %958 = vmatpush1.msra.mxu0 0.0
    %959 = vmatprep.subr.mxu0 0.0
    %960 = vmatpush1.msra.mxu0 0.0
    %961 = vmatprep.subr.mxu0 0.0
    %962 = vmatpush1.msra.mxu0 0.0
    %963 = vmatprep.subr.mxu0 0.0
    %964 = vmatpush1.msra.mxu0 0.0
    %965 = vmatprep.subr.mxu0 0.0
    %966 = vmatpush1.msra.mxu0 0.0
    %967 = vmatprep.subr.mxu0 0.0
    %968 = vmatpush1.msra.mxu0 0.0
    %969 = vmatprep.subr.mxu0 0.0
    %970 = vmatpush1.msra.mxu0 0.0
    %971 = vmatprep.subr.mxu0 0.0
    %972 = vmatpush1.msra.mxu0 0.0
    %973 = vmatprep.subr.mxu0 0.0
    %974 = vmatpush1.msra.mxu0 0.0
    %975 = vmatprep.subr.mxu0 0.0
    %976 = vmatpush1.msra.mxu0 0.0
    %977 = vmatprep.subr.mxu0 0.0
    %978 = vmatpush1.msra.mxu0 0.0
    %979 = vmatprep.subr.mxu0 0.0
    %980 = vmatpush1.msra.mxu0 0.0
    %981 = vmatprep.subr.mxu0 0.0
    %982 = vmatpush1.msra.mxu0 0.0
    %983 = vmatprep.subr.mxu0 0.0
    %984 = vmatpush1.msra.mxu0 0.0
    %985 = vmatprep.subr.mxu0 0.0
    %986 = vmatpush1.msra.mxu0 0.0
    %987 = vmatprep.subr.mxu0 0.0
    %988 = vmatpush1.msra.mxu0 0.0
    %989 = vmatprep.subr.mxu0 0.0
    %990 = vmatpush1.msra.mxu0 0.0
    %991 = vmatprep.subr.mxu0 0.0
    %992 = vmatpush1.msra.mxu0 0.0
    %993 = vmatprep.subr.mxu0 0.0
    %994 = vmatpush1.msra.mxu0 0.0
    %995 = vmatprep.subr.mxu0 0.0
    %996 = vmatpush1.msra.mxu0 0.0
    %997 = vmatprep.subr.mxu0 0.0
    %998 = vmatpush1.msra.mxu0 0.0
    %999 = vmatprep.subr.mxu0 0.0
    %1000 = vmatpush1.msra.mxu0 0.0
    %1001 = vmatprep.subr.mxu0 0.0
    %1002 = vmatpush1.msra.mxu0 0.0
    %1003 = vmatprep.mubr.f32.mxu0 0.0
    %1004 = vmatmul.mubr.f32.gmra.mrb[0].mxu0 %v937
    %v1005 = vpop.f32.mrb[0].mxu0
    %v1006 = vadd.f32 %v934, %v1005
    %v1007 = vpop.f32.mrb[0].mxu0
    %1008 = vdwg.mxu0
    %v1009 = vsel %vm542, %v1006, 0.0
    %v1010 = vrot.slane %v1009, 4
    %v1011 = vadd.f32 %v1009, %v1010
    %v1012 = vrot.slane %v1011, 2
    %v1013 = vadd.f32 %v1011, %v1012
    %v1014 = vrot.slane %v1013, 1
    %v1015 = vadd.f32 %v1013, %v1014
    %v1016 = vmul.f32 %v1015, %v424
    %v1017 = vsub.f32 %v1006, %v1016
    %v1018 = vmul.f32 %v1017, %v1017
    %v1019 = vsel %vm542, %v1018, 0.0
    %v1020 = vrot.slane %v1019, 4
    %v1021 = vadd.f32 %v1019, %v1020
    %v1022 = vrot.slane %v1021, 2
    %v1023 = vadd.f32 %v1021, %v1022
    %v1024 = vrot.slane %v1023, 1
    %v1025 = vadd.f32 %v1023, %v1024
    %v1026 = vmul.f32 %v1025, %v424
    %v1027 = vadd.f32 %v1026, 1e-05
    %v1028 = vrsqrt.pop %v1027
    %v1029 = vmul.f32 %v1017, %v1028
    %v1030 = vld [vmem:[%s45] sm:$0x1]
    %v1032 = vlaneseq
    %v1033 = vshrl.u32 %v1032, 7
    %v1034 = vsub.s32 0, %v1033
    %v1035 = vrot.slane %v1030, %v1034
    %v1037 = vmul.f32 %v1029, %v1035
    %v1038 = vld [vmem:[%s47] sm:$0x1]
    %v1040 = vlaneseq
    %v1041 = vshrl.u32 %v1040, 7
    %v1042 = vsub.s32 0, %v1041
    %v1043 = vrot.slane %v1038, %v1042
    %v1045 = vadd.f32 %v1037, %v1043
    %vm1046 = vcmp.gt.f32.partialorder %v1045, 0.0
    %v1047 = vmul.f32 %v1045, 0.01
    %v1048 = vsel %vm1046, %v1045, %v1047
    %1050 = vrot.lane.b32.xlu0 %v1006, 112
    %v1051 = vpop.permute.xlu0 %1050
    %v1053 = vadd.f32 %v1048, %v1051
    %v1054 = vld [vmem:[%s49] sm:$0xff]
    %v1055 = vld [vmem:[%s49 + $0x8] sm:$0xff]
    %v1056 = vld [vmem:[%s51] sm:$0x1]
    %v1058 = vlaneseq
    %v1059 = vshrl.u32 %v1058, 7
    %v1060 = vsub.s32 0, %v1059
    %v1061 = vrot.slane %v1056, %v1060
    %v1064 = vsel %vm542, %v1053, 0
    %1066 = vmatprep.subr.mxu0 0.0
    %1067 = vmatpush1.msra.mxu0 %v1054
    %1068 = vmatprep.subr.mxu0 0.0
    %1069 = vmatpush1.msra.mxu0 %v1055
    %1070 = vmatprep.subr.mxu0 0.0
    %1071 = vmatpush1.msra.mxu0 0.0
    %1072 = vmatprep.subr.mxu0 0.0
    %1073 = vmatpush1.msra.mxu0 0.0
    %1074 = vmatprep.subr.mxu0 0.0
    %1075 = vmatpush1.msra.mxu0 0.0
    %1076 = vmatprep.subr.mxu0 0.0
    %1077 = vmatpush1.msra.mxu0 0.0
    %1078 = vmatprep.subr.mxu0 0.0
    %1079 = vmatpush1.msra.mxu0 0.0
    %1080 = vmatprep.subr.mxu0 0.0
    %1081 = vmatpush1.msra.mxu0 0.0
    %1082 = vmatprep.subr.mxu0 0.0
    %1083 = vmatpush1.msra.mxu0 0.0
    %1084 = vmatprep.subr.mxu0 0.0
    %1085 = vmatpush1.msra.mxu0 0.0
    %1086 = vmatprep.subr.mxu0 0.0
    %1087 = vmatpush1.msra.mxu0 0.0
    %1088 = vmatprep.subr.mxu0 0.0
    %1089 = vmatpush1.msra.mxu0 0.0
    %1090 = vmatprep.subr.mxu0 0.0
    %1091 = vmatpush1.msra.mxu0 0.0
    %1092 = vmatprep.subr.mxu0 0.0
    %1093 = vmatpush1.msra.mxu0 0.0
    %1094 = vmatprep.subr.mxu0 0.0
    %1095 = vmatpush1.msra.mxu0 0.0
    %1096 = vmatprep.subr.mxu0 0.0
    %1097 = vmatpush1.msra.mxu0 0.0
    %1098 = vmatprep.subr.mxu0 0.0
    %1099 = vmatpush1.msra.mxu0 0.0
    %1100 = vmatprep.subr.mxu0 0.0
    %1101 = vmatpush1.msra.mxu0 0.0
    %1102 = vmatprep.subr.mxu0 0.0
    %1103 = vmatpush1.msra.mxu0 0.0
    %1104 = vmatprep.subr.mxu0 0.0
    %1105 = vmatpush1.msra.mxu0 0.0
    %1106 = vmatprep.subr.mxu0 0.0
    %1107 = vmatpush1.msra.mxu0 0.0
    %1108 = vmatprep.subr.mxu0 0.0
    %1109 = vmatpush1.msra.mxu0 0.0
    %1110 = vmatprep.subr.mxu0 0.0
    %1111 = vmatpush1.msra.mxu0 0.0
    %1112 = vmatprep.subr.mxu0 0.0
    %1113 = vmatpush1.msra.mxu0 0.0
    %1114 = vmatprep.subr.mxu0 0.0
    %1115 = vmatpush1.msra.mxu0 0.0
    %1116 = vmatprep.subr.mxu0 0.0
    %1117 = vmatpush1.msra.mxu0 0.0
    %1118 = vmatprep.subr.mxu0 0.0
    %1119 = vmatpush1.msra.mxu0 0.0
    %1120 = vmatprep.subr.mxu0 0.0
    %1121 = vmatpush1.msra.mxu0 0.0
    %1122 = vmatprep.subr.mxu0 0.0
    %1123 = vmatpush1.msra.mxu0 0.0
    %1124 = vmatprep.subr.mxu0 0.0
    %1125 = vmatpush1.msra.mxu0 0.0
    %1126 = vmatprep.subr.mxu0 0.0
    %1127 = vmatpush1.msra.mxu0 0.0
    %1128 = vmatprep.subr.mxu0 0.0
    %1129 = vmatpush1.msra.mxu0 0.0
    %1130 = vmatprep.mubr.f32.mxu0 0.0
    %1131 = vmatmul.mubr.f32.gmra.mrb[0].mxu0 %v1064
    %v1132 = vpop.f32.mrb[0].mxu0
    %v1133 = vadd.f32 %v1061, %v1132
    %v1134 = vpop.f32.mrb[0].mxu0
    %1135 = vdwg.mxu0
    %v1136 = vsel %vm343, %v1133, 0.0
    %v1137 = vrot.slane %v1136, 4
    %v1138 = vadd.f32 %v1136, %v1137
    %v1139 = vrot.slane %v1138, 2
    %v1140 = vadd.f32 %v1138, %v1139
    %v1141 = vrot.slane %v1140, 1
    %v1142 = vadd.f32 %v1140, %v1141
    %v1143 = vmul.f32 %v1142, %v424
    %v1144 = vsub.f32 %v1133, %v1143
    %v1145 = vmul.f32 %v1144, %v1144
    %v1146 = vsel %vm343, %v1145, 0.0
    %v1147 = vrot.slane %v1146, 4
    %v1148 = vadd.f32 %v1146, %v1147
    %v1149 = vrot.slane %v1148, 2
    %v1150 = vadd.f32 %v1148, %v1149
    %v1151 = vrot.slane %v1150, 1
    %v1152 = vadd.f32 %v1150, %v1151
    %v1153 = vmul.f32 %v1152, %v424
    %v1154 = vadd.f32 %v1153, 1e-05
    %v1155 = vrsqrt.pop %v1154
    %v1156 = vmul.f32 %v1144, %v1155
    %v1157 = vld [vmem:[%s53] sm:$0x1]
    %v1159 = vlaneseq
    %v1160 = vshrl.u32 %v1159, 7
    %v1161 = vsub.s32 0, %v1160
    %v1162 = vrot.slane %v1157, %v1161
    %v1164 = vmul.f32 %v1156, %v1162
    %v1165 = vld [vmem:[%s55] sm:$0x1]
    %v1167 = vlaneseq
    %v1168 = vshrl.u32 %v1167, 7
    %v1169 = vsub.s32 0, %v1168
    %v1170 = vrot.slane %v1165, %v1169
    %v1172 = vadd.f32 %v1164, %v1170
    %vm1173 = vcmp.gt.f32.partialorder %v1172, 0.0
    %v1174 = vmul.f32 %v1172, 0.01
    %v1175 = vsel %vm1173, %v1172, %v1174
    %1177 = vrot.lane.b32.xlu0 %v1133, 96
    %v1178 = vpop.permute.xlu0 %1177
    %v1180 = vadd.f32 %v1175, %v1178
    %v1181 = vld [vmem:[%s57] sm:$0xff]
    %v1182 = vld [vmem:[%s57 + $0x8] sm:$0xff]
    %v1183 = vld [vmem:[%s57 + $0x10] sm:$0xff]
    %v1184 = vld [vmem:[%s57 + $0x18] sm:$0xff]
    %v1185 = vld [vmem:[%s59] sm:$0x1]
    %v1187 = vlaneseq
    %v1188 = vshrl.u32 %v1187, 7
    %v1189 = vsub.s32 0, %v1188
    %v1190 = vrot.slane %v1185, %v1189
    %v1193 = vsel %vm343, %v1180, 0
    %1195 = vmatprep.subr.mxu0 0.0
    %1196 = vmatpush1.msra.mxu0 %v1181
    %1197 = vmatprep.subr.mxu0 0.0
    %1198 = vmatpush1.msra.mxu0 %v1182
    %1199 = vmatprep.subr.mxu0 0.0
    %1200 = vmatpush1.msra.mxu0 %v1183
    %1201 = vmatprep.subr.mxu0 0.0
    %1202 = vmatpush1.msra.mxu0 %v1184
    %1203 = vmatprep.subr.mxu0 0.0
    %1204 = vmatpush1.msra.mxu0 0.0
    %1205 = vmatprep.subr.mxu0 0.0
    %1206 = vmatpush1.msra.mxu0 0.0
    %1207 = vmatprep.subr.mxu0 0.0
    %1208 = vmatpush1.msra.mxu0 0.0
    %1209 = vmatprep.subr.mxu0 0.0
    %1210 = vmatpush1.msra.mxu0 0.0
    %1211 = vmatprep.subr.mxu0 0.0
    %1212 = vmatpush1.msra.mxu0 0.0
    %1213 = vmatprep.subr.mxu0 0.0
    %1214 = vmatpush1.msra.mxu0 0.0
    %1215 = vmatprep.subr.mxu0 0.0
    %1216 = vmatpush1.msra.mxu0 0.0
    %1217 = vmatprep.subr.mxu0 0.0
    %1218 = vmatpush1.msra.mxu0 0.0
    %1219 = vmatprep.subr.mxu0 0.0
    %1220 = vmatpush1.msra.mxu0 0.0
    %1221 = vmatprep.subr.mxu0 0.0
    %1222 = vmatpush1.msra.mxu0 0.0
    %1223 = vmatprep.subr.mxu0 0.0
    %1224 = vmatpush1.msra.mxu0 0.0
    %1225 = vmatprep.subr.mxu0 0.0
    %1226 = vmatpush1.msra.mxu0 0.0
    %1227 = vmatprep.subr.mxu0 0.0
    %1228 = vmatpush1.msra.mxu0 0.0
    %1229 = vmatprep.subr.mxu0 0.0
    %1230 = vmatpush1.msra.mxu0 0.0
    %1231 = vmatprep.subr.mxu0 0.0
    %1232 = vmatpush1.msra.mxu0 0.0
    %1233 = vmatprep.subr.mxu0 0.0
    %1234 = vmatpush1.msra.mxu0 0.0
    %1235 = vmatprep.subr.mxu0 0.0
    %1236 = vmatpush1.msra.mxu0 0.0
    %1237 = vmatprep.subr.mxu0 0.0
    %1238 = vmatpush1.msra.mxu0 0.0
    %1239 = vmatprep.subr.mxu0 0.0
    %1240 = vmatpush1.msra.mxu0 0.0
    %1241 = vmatprep.subr.mxu0 0.0
    %1242 = vmatpush1.msra.mxu0 0.0
    %1243 = vmatprep.subr.mxu0 0.0
    %1244 = vmatpush1.msra.mxu0 0.0
    %1245 = vmatprep.subr.mxu0 0.0
    %1246 = vmatpush1.msra.mxu0 0.0
    %1247 = vmatprep.subr.mxu0 0.0
    %1248 = vmatpush1.msra.mxu0 0.0
    %1249 = vmatprep.subr.mxu0 0.0
    %1250 = vmatpush1.msra.mxu0 0.0
    %1251 = vmatprep.subr.mxu0 0.0
    %1252 = vmatpush1.msra.mxu0 0.0
    %1253 = vmatprep.subr.mxu0 0.0
    %1254 = vmatpush1.msra.mxu0 0.0
    %1255 = vmatprep.subr.mxu0 0.0
    %1256 = vmatpush1.msra.mxu0 0.0
    %1257 = vmatprep.subr.mxu0 0.0
    %1258 = vmatpush1.msra.mxu0 0.0
    %1259 = vmatprep.mubr.f32.mxu0 0.0
    %1260 = vmatmul.mubr.f32.gmra.mrb[0].mxu0 %v1193
    %v1261 = vpop.f32.mrb[0].mxu0
    %v1262 = vadd.f32 %v1190, %v1261
    %v1263 = vpop.f32.mrb[0].mxu0
    %1264 = vdwg.mxu0
    %1265 = vst.msk [vmem:[#allocation29] sm:$0xff] %vm343, %v1262
    %1266 = vst.msk [vmem:[#allocation30] sm:$0xff] %vm542, %v794
    // Predicated region
    $region190: #{tpu_custom_call.1} parent=1 // pred_check
      _
    $region191: #{tpu_custom_call.1} parent=1 // pred_check_branch
      %1268 = sbr.rel (0) target = $region193
    $region192: #{tpu_custom_call.1} parent=1 // pred_region
      %s1270 = ssub.s32 128, 128
      %1271 = vsyncadd [#allocation4], %s1270
      %s1273 = sshll.u32 [#allocation29], 4
      %s1274 = int_to_ptr.vmem [resolvable:$true] %s1273
      %1276 = dma.vmem_to_hbm [thread:$0]  %s1274, 128, %s61, [#allocation4]
    $region193: #{tpu_custom_call.1} parent=1 // pred_fallthru
      _
    // Predicated region
    $region194: #{tpu_custom_call.1} parent=1 // pred_check
      _
    $region195: #{tpu_custom_call.1} parent=1 // pred_check_branch
      %1278 = sbr.rel (0) target = $region197
    $region196: #{tpu_custom_call.1} parent=1 // pred_region
      %s1280 = ssub.s32 128, 128
      %1281 = vsyncadd [#allocation31], %s1280
      %s1283 = sshll.u32 [#allocation30], 4
      %s1284 = int_to_ptr.vmem [resolvable:$true] %s1283
      %1286 = dma.vmem_to_hbm [thread:$0]  %s1284, 128, %s63, [#allocation31]
    $region197: #{tpu_custom_call.1} parent=1 // pred_fallthru
      _
    // Predicated region
    $region198: #{tpu_custom_call.1} parent=1 // pred_check
      _
    $region199: #{tpu_custom_call.1} parent=1 // pred_check_branch
      %1288 = sbr.rel (0) target = $region201
    $region200: #{tpu_custom_call.1} parent=1 // pred_region
      %1289 = dma.done [#allocation4], 128
    $region201: #{tpu_custom_call.1} parent=1 // pred_fallthru
      _
    // Predicated region
    $region202: #{tpu_custom_call.1} parent=1 // pred_check
      _
    $region203: #{tpu_custom_call.1} parent=1 // pred_check_branch
      %1291 = sbr.rel (0) target = $region205
    $region204: #{tpu_custom_call.1} parent=1 // pred_region
      %1292 = dma.done [#allocation31], 128
    $region205: #{tpu_custom_call.1} parent=1 // pred_fallthru
      _
    %1293 = vsyncpa [#allocation3], 1
    %1294 = vsyncpa [#allocation6], 1
    %1295 = vsyncpa [#allocation9], 1
    %1296 = vsyncpa [#allocation12], 1
    %1297 = vsyncpa [#allocation15], 1
    %1298 = vsyncpa [#allocation18], 1
    %1299 = vsyncpa [#allocation21], 1
    %1300 = vsyncpa [#allocation24], 1
    %1301 = vsyncpa [#allocation27], 1
    %1302 = vsyncpa [#allocation4], 1
    %1303 = vsyncpa [#allocation31], 1

</llo_original>
